<compile_context>
chip_gen: v7x
topology: tpu7x:2x2x1
jax: 0.10.0
libtpu: 0.0.40
codegen_flags: <defaults>
</compile_context>

<pallas_src>
import functools

import jax
import jax.numpy as jnp
from jax.experimental import pallas as pl
from jax.experimental.pallas import tpu as pltpu


# ------------------------------ Pallas kernel --------------------------------


def _mha_kernel(q_ref, k_ref, v_ref,
                wq_ref, bq_ref, wk_ref, bk_ref, wv_ref, bv_ref,
                wm_ref, bm_ref, o_ref, *, num_heads, head_dim, n_valid):
    """Fused QKV projection + multi-head attention + merge for one batch element.

    q/k/v refs: [1, D, Np] (channels on sublanes, padded positions on lanes).
    Projection weights are head-grouped (rows), bf16; the merge weight is
    pre-split per head as [H, D, dim], bf16. Biases are f32 [D, 1].
    """
    f32 = jnp.float32
    bf16 = jnp.bfloat16
    H, dim = num_heads, head_dim
    D = H * dim
    Np = q_ref.shape[-1]

    q = q_ref[0].astype(bf16)                       # [D, Np]
    k = k_ref[0].astype(bf16)
    v = v_ref[0].astype(bf16)

    # 1x1-conv projections: bf16 operands, f32 MXU accumulation, f32 bias add.
    # 1/sqrt(head_dim) is pre-folded into wq/bq.
    qp = (jnp.dot(wq_ref[...], q, preferred_element_type=f32) + bq_ref[...]).astype(bf16)
    kp = (jnp.dot(wk_ref[...], k, preferred_element_type=f32) + bk_ref[...]).astype(bf16)
    vp = (jnp.dot(wv_ref[...], v, preferred_element_type=f32) + bv_ref[...]).astype(bf16)

    # Key-padding mask (rows of the transposed scores). Static condition: zero
    # cost when N is already a multiple of 128.
    if n_valid < Np:
        key_row = jax.lax.broadcasted_iota(jnp.int32, (Np, 1), 0)
        key_valid = key_row < n_valid               # [Np, 1], broadcast over lanes
    else:
        key_valid = None

    out = jnp.zeros((D, Np), f32)
    for h in range(H):                              # static unroll, H is small
        sl = slice(h * dim, (h + 1) * dim)
        qh, kh, vh = qp[sl], kp[sl], vp[sl]         # [dim, Np] bf16 sublane slices

        # Transposed scores: scores_t[m, n] = sum_d kh[d, m] * qh[d, n].
        # [keys, queries] orientation -> the PV matmul below is fully native
        # (contract vh's lane axis with e's sublane axis), no N x N transpose.
        scores_t = jax.lax.dot_general(
            kh, qh, (((0,), (0,)), ((), ())),
            preferred_element_type=f32)             # [Np(keys), Np(queries)] f32

        if key_valid is not None:
            scores_t = jnp.where(key_valid, scores_t, -1e30)

        # Softmax over keys (sublane axis), normalization deferred past PV.
        m = jnp.max(scores_t, axis=0, keepdims=True)        # [1, Np]
        e = jnp.exp(scores_t - m)                           # [Np, Np] f32
        s = jnp.sum(e, axis=0, keepdims=True)               # [1, Np]

        # ctx[d, n] = sum_m vh[d, m] * e[m, n]  (deep contraction over keys).
        ctx = jnp.dot(vh, e.astype(bf16), preferred_element_type=f32)   # [dim, Np]
        ctx = ctx * pl.reciprocal(s, approx=True)           # deferred 1/sum (EUP)

        # Per-head merge accumulation (no concat; one head's ctx live at a time).
        out = out + jnp.dot(wm_ref[h], ctx.astype(bf16),
                            preferred_element_type=f32)     # [D, Np]

    out = out + bm_ref[...]
    o_ref[0] = out.astype(o_ref.dtype)


# ---------------------------- Module wrapper ----------------------------------


class MultiHeadedAttentionPallas:
    """JAX/Pallas equivalent of SuperGlue's MultiHeadedAttention forward."""

    def __init__(self, num_heads, d_model, rng_key):
        assert d_model % num_heads == 0
        self.num_heads = num_heads
        self.d_model = d_model
        self.head_dim = d_model // num_heads

        # PyTorch Conv1d default init: U(-1/sqrt(Cin), 1/sqrt(Cin)) for weight & bias.
        bound = 1.0 / (d_model ** 0.5)
        ks = jax.random.split(rng_key, 8)

        def init_wb(kw, kb):
            w = jax.random.uniform(kw, (d_model, d_model), jnp.float32, -bound, bound)
            b = jax.random.uniform(kb, (d_model,), jnp.float32, -bound, bound)
            return w, b

        self.wq, self.bq = init_wb(ks[0], ks[1])
        self.wk, self.bk = init_wb(ks[2], ks[3])
        self.wv, self.bv = init_wb(ks[4], ks[5])
        self.wm, self.bm = init_wb(ks[6], ks[7])

        # Head-grouping permutation: grouped channel c' = h*dim + d maps to the
        # original PyTorch channel perm[c'] = d*num_heads + h (from .view(B,dim,H,N)).
        H, dim, D = num_heads, self.head_dim, d_model
        cprime = jnp.arange(D)
        perm = (cprime % dim) * H + (cprime // dim)
        inv_sqrt_dim = 1.0 / (dim ** 0.5)

        # Kernel-side parameters: head-grouped, 1/sqrt(dim) folded into the query
        # projection, weights in bf16 (MXU operands), biases kept f32.
        self.wq_g = (self.wq[perm, :] * inv_sqrt_dim).astype(jnp.bfloat16)
        self.bq_g = (self.bq[perm] * inv_sqrt_dim).reshape(D, 1)
        self.wk_g = self.wk[perm, :].astype(jnp.bfloat16)
        self.bk_g = self.bk[perm].reshape(D, 1)
        self.wv_g = self.wv[perm, :].astype(jnp.bfloat16)
        self.bv_g = self.bv[perm].reshape(D, 1)
        # Merge weight: head-grouped columns, pre-split per head -> [H, D, dim].
        self.wm_g = (self.wm[:, perm].reshape(D, H, dim)
                     .transpose(1, 0, 2).astype(jnp.bfloat16))
        self.bm_g = self.bm.reshape(D, 1)

    def __call__(self, query, key, value):
        # query/key/value: [B, d_model, N]  ->  output [B, d_model, N]
        B, D, N = query.shape
        H, dim = self.num_heads, self.head_dim
        assert D == self.d_model

        # Lane-dense layout: pad positions to a multiple of 128 (full vregs,
        # unmasked stores); padded keys are masked in-kernel, padded query
        # columns are sliced off below.
        Np = ((N + 127) // 128) * 128
        if Np != N:
            pad = ((0, 0), (0, 0), (0, Np - N))
            query = jnp.pad(query, pad)
            key = jnp.pad(key, pad)
            value = jnp.pad(value, pad)

        kernel = functools.partial(_mha_kernel, num_heads=H, head_dim=dim, n_valid=N)
        per_b = lambda b: (b, 0, 0)
        full2d = lambda b: (0, 0)
        full3d = lambda b: (0, 0, 0)

        # Advisory only (ignores per-grid-step weight re-reads).
        flops = B * (4 * 2 * D * D * Np + H * 2 * 2 * dim * Np * Np)
        transcendentals = B * H * Np * Np
        bytes_accessed = (4 * 4 * B * D * N
                          + 2 * (3 * D * D + H * D * dim)
                          + 4 * 4 * D)

        out = pl.pallas_call(
            kernel,
            out_shape=jax.ShapeDtypeStruct((B, D, Np), jnp.float32),
            grid=(B,),
            in_specs=[
                pl.BlockSpec((1, D, Np), per_b),      # query
                pl.BlockSpec((1, D, Np), per_b),      # key
                pl.BlockSpec((1, D, Np), per_b),      # value
                pl.BlockSpec((D, D), full2d),         # Wq (scaled, head-grouped)
                pl.BlockSpec((D, 1), full2d),         # bq (scaled)
                pl.BlockSpec((D, D), full2d),         # Wk
                pl.BlockSpec((D, 1), full2d),         # bk
                pl.BlockSpec((D, D), full2d),         # Wv
                pl.BlockSpec((D, 1), full2d),         # bv
                pl.BlockSpec((H, D, dim), full3d),    # W_merge split per head
                pl.BlockSpec((D, 1), full2d),         # b_merge
            ],
            out_specs=pl.BlockSpec((1, D, Np), per_b),
            compiler_params=pltpu.CompilerParams(
                dimension_semantics=("parallel",),
                vmem_limit_bytes=32 * 1024 * 1024),
            cost_estimate=pl.CostEstimate(
                flops=flops,
                transcendentals=transcendentals,
                bytes_accessed=bytes_accessed),
        )(query, key, value,
          self.wq_g, self.bq_g, self.wk_g, self.bk_g,
          self.wv_g, self.bv_g, self.wm_g, self.bm_g)

        return out[:, :, :N] if Np != N else out

    # Pure-JAX reference that follows the PyTorch code verbatim (original f32
    # weights, original channel ordering) — validates the permutation folding,
    # scale folding, transposed-score formulation and masking in the kernel.
    def reference(self, query, key, value):
        B, D, N = query.shape
        H, dim = self.num_heads, self.head_dim

        def conv1x1(w, b, x):
            return jnp.einsum('oc,bcn->bon', w, x) + b[None, :, None]

        qp = conv1x1(self.wq, self.bq, query).reshape(B, dim, H, N)
        kp = conv1x1(self.wk, self.bk, key).reshape(B, dim, H, N)
        vp = conv1x1(self.wv, self.bv, value).reshape(B, dim, H, N)

        scores = jnp.einsum('bdhn,bdhm->bhnm', qp, kp) / (dim ** 0.5)
        prob = jax.nn.softmax(scores, axis=-1)
        ctx = jnp.einsum('bhnm,bdhm->bdhn', prob, vp).reshape(B, dim * H, N)
        return conv1x1(self.wm, self.bm, ctx)


# ---------------------------------- main --------------------------------------

if __name__ == "__main__":
    root = jax.random.PRNGKey(0)
    k_mod, k_q, k_k, k_v = jax.random.split(root, 4)

    num_heads = 4
    d_model = 64          # small stand-in for SuperGlue's d_model=256
    B, N = 2, 64          # batch of 2, 64 keypoints (exercises the pad/mask path)

    mha = MultiHeadedAttentionPallas(num_heads, d_model, k_mod)

    query = jax.random.normal(k_q, (B, d_model, N), jnp.float32)
    key = jax.random.normal(k_k, (B, d_model, N), jnp.float32)
    value = jax.random.normal(k_v, (B, d_model, N), jnp.float32)

    out = mha(query, key, value)
    out = jax.block_until_ready(out)

    ref = mha.reference(query, key, value)
    assert out.shape == (B, d_model, N), out.shape
    # bf16 MXU operands + approx reciprocal vs. the exact-f32 reference: loosen
    # tolerance accordingly (expected max abs error is well below 1e-2 here).
    assert jnp.allclose(out, ref, atol=3e-2, rtol=3e-2), "mismatch vs JAX reference"

    print("KERNEL_OK")
</pallas_src>

<mosaic_0001>
module attributes {stable_mosaic.version = 11 : i64} {
  func.func @_mha_kernel(%arg0: i32, %arg1: memref<1x64x128xf32, #tpu.memory_space<vmem>>, %arg2: memref<1x64x128xf32, #tpu.memory_space<vmem>>, %arg3: memref<1x64x128xf32, #tpu.memory_space<vmem>>, %arg4: memref<64x64xbf16, #tpu.memory_space<vmem>>, %arg5: memref<64x1xf32, #tpu.memory_space<vmem>>, %arg6: memref<64x64xbf16, #tpu.memory_space<vmem>>, %arg7: memref<64x1xf32, #tpu.memory_space<vmem>>, %arg8: memref<64x64xbf16, #tpu.memory_space<vmem>>, %arg9: memref<64x1xf32, #tpu.memory_space<vmem>>, %arg10: memref<4x64x16xbf16, #tpu.memory_space<vmem>>, %arg11: memref<64x1xf32, #tpu.memory_space<vmem>>, %arg12: memref<1x64x128xf32, #tpu.memory_space<vmem>>) attributes {dimension_semantics = [#tpu.dimension_semantics<parallel>], iteration_bounds = array<i64: 2>, scalar_prefetch = 0 : i64, scratch_operands = 0 : i64, tpu.core_type = #tpu.core_type<tc>, window_params = [{transform_indices = @transform_0, window_bounds = array<i64: 1, 64, 128>}, {transform_indices = @transform_1, window_bounds = array<i64: 1, 64, 128>}, {transform_indices = @transform_2, window_bounds = array<i64: 1, 64, 128>}, {pipeline_mode = #tpu.pipeline_mode<synchronous>, transform_indices = @transform_3, window_bounds = array<i64: 64, 64>}, {pipeline_mode = #tpu.pipeline_mode<synchronous>, transform_indices = @transform_4, window_bounds = array<i64: 64, 1>}, {pipeline_mode = #tpu.pipeline_mode<synchronous>, transform_indices = @transform_5, window_bounds = array<i64: 64, 64>}, {pipeline_mode = #tpu.pipeline_mode<synchronous>, transform_indices = @transform_6, window_bounds = array<i64: 64, 1>}, {pipeline_mode = #tpu.pipeline_mode<synchronous>, transform_indices = @transform_7, window_bounds = array<i64: 64, 64>}, {pipeline_mode = #tpu.pipeline_mode<synchronous>, transform_indices = @transform_8, window_bounds = array<i64: 64, 1>}, {pipeline_mode = #tpu.pipeline_mode<synchronous>, transform_indices = @transform_9, window_bounds = array<i64: 4, 64, 16>}, {pipeline_mode = #tpu.pipeline_mode<synchronous>, transform_indices = @transform_10, window_bounds = array<i64: 64, 1>}, {transform_indices = @transform_11, window_bounds = array<i64: 1, 64, 128>}]} {
    %c0 = arith.constant 0 : index
    %c0_0 = arith.constant 0 : index
    %c0_1 = arith.constant 0 : index
    %0 = vector.load %arg1[%c0, %c0_0, %c0_1] : memref<1x64x128xf32, #tpu.memory_space<vmem>>, vector<1x64x128xf32>
    %1 = vector.shape_cast %0 : vector<1x64x128xf32> to vector<64x128xf32>
    %2 = arith.truncf %1 : vector<64x128xf32> to vector<64x128xbf16>
    %c0_2 = arith.constant 0 : index
    %c0_3 = arith.constant 0 : index
    %c0_4 = arith.constant 0 : index
    %3 = vector.load %arg2[%c0_2, %c0_3, %c0_4] : memref<1x64x128xf32, #tpu.memory_space<vmem>>, vector<1x64x128xf32>
    %4 = vector.shape_cast %3 : vector<1x64x128xf32> to vector<64x128xf32>
    %5 = arith.truncf %4 : vector<64x128xf32> to vector<64x128xbf16>
    %c0_5 = arith.constant 0 : index
    %c0_6 = arith.constant 0 : index
    %c0_7 = arith.constant 0 : index
    %6 = vector.load %arg3[%c0_5, %c0_6, %c0_7] : memref<1x64x128xf32, #tpu.memory_space<vmem>>, vector<1x64x128xf32>
    %7 = vector.shape_cast %6 : vector<1x64x128xf32> to vector<64x128xf32>
    %8 = arith.truncf %7 : vector<64x128xf32> to vector<64x128xbf16>
    %c0_8 = arith.constant 0 : index
    %c0_9 = arith.constant 0 : index
    %9 = vector.load %arg4[%c0_8, %c0_9] : memref<64x64xbf16, #tpu.memory_space<vmem>>, vector<64x64xbf16>
    %cst = arith.constant dense<0.000000e+00> : vector<64x128xf32>
    %10 = tpu.matmul %9, %2, %cst {dimension_numbers = #tpu.dot_dimension_numbers<[1], [0], [0], [1], [0, 0, 1, 1], [], []>} : vector<64x64xbf16>, vector<64x128xbf16>, vector<64x128xf32> -> vector<64x128xf32>
    %c0_10 = arith.constant 0 : index
    %c0_11 = arith.constant 0 : index
    %11 = vector.load %arg5[%c0_10, %c0_11] : memref<64x1xf32, #tpu.memory_space<vmem>>, vector<64x1xf32>
    %12 = vector.broadcast %11 : vector<64x1xf32> to vector<64x128xf32>
    %13 = arith.addf %10, %12 : vector<64x128xf32>
    %14 = arith.truncf %13 : vector<64x128xf32> to vector<64x128xbf16>
    %c0_12 = arith.constant 0 : index
    %c0_13 = arith.constant 0 : index
    %15 = vector.load %arg6[%c0_12, %c0_13] : memref<64x64xbf16, #tpu.memory_space<vmem>>, vector<64x64xbf16>
    %cst_14 = arith.constant dense<0.000000e+00> : vector<64x128xf32>
    %16 = tpu.matmul %15, %5, %cst_14 {dimension_numbers = #tpu.dot_dimension_numbers<[1], [0], [0], [1], [0, 0, 1, 1], [], []>} : vector<64x64xbf16>, vector<64x128xbf16>, vector<64x128xf32> -> vector<64x128xf32>
    %c0_15 = arith.constant 0 : index
    %c0_16 = arith.constant 0 : index
    %17 = vector.load %arg7[%c0_15, %c0_16] : memref<64x1xf32, #tpu.memory_space<vmem>>, vector<64x1xf32>
    %18 = vector.broadcast %17 : vector<64x1xf32> to vector<64x128xf32>
    %19 = arith.addf %16, %18 : vector<64x128xf32>
    %20 = arith.truncf %19 : vector<64x128xf32> to vector<64x128xbf16>
    %c0_17 = arith.constant 0 : index
    %c0_18 = arith.constant 0 : index
    %21 = vector.load %arg8[%c0_17, %c0_18] : memref<64x64xbf16, #tpu.memory_space<vmem>>, vector<64x64xbf16>
    %cst_19 = arith.constant dense<0.000000e+00> : vector<64x128xf32>
    %22 = tpu.matmul %21, %8, %cst_19 {dimension_numbers = #tpu.dot_dimension_numbers<[1], [0], [0], [1], [0, 0, 1, 1], [], []>} : vector<64x64xbf16>, vector<64x128xbf16>, vector<64x128xf32> -> vector<64x128xf32>
    %c0_20 = arith.constant 0 : index
    %c0_21 = arith.constant 0 : index
    %23 = vector.load %arg9[%c0_20, %c0_21] : memref<64x1xf32, #tpu.memory_space<vmem>>, vector<64x1xf32>
    %24 = vector.broadcast %23 : vector<64x1xf32> to vector<64x128xf32>
    %25 = arith.addf %22, %24 : vector<64x128xf32>
    %26 = arith.truncf %25 : vector<64x128xf32> to vector<64x128xbf16>
    %27 = tpu.iota {dimensions = array<i32: 0>} : vector<128x1xi32>
    %c64_i32 = arith.constant 64 : i32
    %28 = vector.broadcast %c64_i32 : i32 to vector<128x1xi32>
    %29 = arith.cmpi slt, %27, %28 : vector<128x1xi32>
    %cst_22 = arith.constant 0.000000e+00 : f32
    %30 = vector.broadcast %cst_22 : f32 to vector<64x128xf32>
    %31 = vector.extract_strided_slice %14 {offsets = [0, 0], sizes = [16, 128], strides = [1, 1]} : vector<64x128xbf16> to vector<16x128xbf16>
    %32 = vector.extract_strided_slice %20 {offsets = [0, 0], sizes = [16, 128], strides = [1, 1]} : vector<64x128xbf16> to vector<16x128xbf16>
    %33 = vector.extract_strided_slice %26 {offsets = [0, 0], sizes = [16, 128], strides = [1, 1]} : vector<64x128xbf16> to vector<16x128xbf16>
    %cst_23 = arith.constant dense<0.000000e+00> : vector<128x128xf32>
    %34 = tpu.matmul %32, %31, %cst_23 {dimension_numbers = #tpu.dot_dimension_numbers<[0], [0], [1], [1], [0, 1, 1, 1], [], []>} : vector<16x128xbf16>, vector<16x128xbf16>, vector<128x128xf32> -> vector<128x128xf32>
    %cst_24 = arith.constant -1.000000e+30 : f32
    %35 = vector.shape_cast %29 : vector<128x1xi1> to vector<128x1xi1>
    %36 = vector.broadcast %35 : vector<128x1xi1> to vector<128x128xi1>
    %37 = vector.broadcast %cst_24 : f32 to vector<128x128xf32>
    %38 = arith.select %36, %34, %37 : vector<128x128xi1>, vector<128x128xf32>
    %cst_25 = arith.constant dense<0xFF800000> : vector<128xf32>
    %39 = vector.multi_reduction <maximumf>, %38, %cst_25 [0] : vector<128x128xf32> to vector<128xf32>
    %40 = vector.shape_cast %39 : vector<128xf32> to vector<1x128xf32>
    %41 = vector.broadcast %40 : vector<1x128xf32> to vector<128x128xf32>
    %42 = arith.subf %38, %41 : vector<128x128xf32>
    %43 = math.exp %42 : vector<128x128xf32>
    %cst_26 = arith.constant dense<0.000000e+00> : vector<128xf32>
    %44 = vector.multi_reduction <add>, %43, %cst_26 [0] : vector<128x128xf32> to vector<128xf32>
    %45 = vector.shape_cast %44 : vector<128xf32> to vector<1x128xf32>
    %46 = arith.truncf %43 : vector<128x128xf32> to vector<128x128xbf16>
    %cst_27 = arith.constant dense<0.000000e+00> : vector<16x128xf32>
    %47 = tpu.matmul %33, %46, %cst_27 {dimension_numbers = #tpu.dot_dimension_numbers<[1], [0], [0], [1], [0, 0, 1, 1], [], []>} : vector<16x128xbf16>, vector<128x128xbf16>, vector<16x128xf32> -> vector<16x128xf32>
    %48 = tpu.reciprocal %45 {approx = true} : vector<1x128xf32> -> vector<1x128xf32>
    %49 = vector.broadcast %48 : vector<1x128xf32> to vector<16x128xf32>
    %50 = arith.mulf %47, %49 : vector<16x128xf32>
    %c0_28 = arith.constant 0 : index
    %c0_29 = arith.constant 0 : index
    %c0_30 = arith.constant 0 : index
    %51 = vector.load %arg10[%c0_28, %c0_29, %c0_30] : memref<4x64x16xbf16, #tpu.memory_space<vmem>>, vector<1x64x16xbf16>
    %52 = vector.shape_cast %51 : vector<1x64x16xbf16> to vector<64x16xbf16>
    %53 = arith.truncf %50 : vector<16x128xf32> to vector<16x128xbf16>
    %cst_31 = arith.constant dense<0.000000e+00> : vector<64x128xf32>
    %54 = tpu.matmul %52, %53, %cst_31 {dimension_numbers = #tpu.dot_dimension_numbers<[1], [0], [0], [1], [0, 0, 1, 1], [], []>} : vector<64x16xbf16>, vector<16x128xbf16>, vector<64x128xf32> -> vector<64x128xf32>
    %55 = arith.addf %30, %54 : vector<64x128xf32>
    %56 = vector.extract_strided_slice %14 {offsets = [16, 0], sizes = [16, 128], strides = [1, 1]} : vector<64x128xbf16> to vector<16x128xbf16>
    %57 = vector.extract_strided_slice %20 {offsets = [16, 0], sizes = [16, 128], strides = [1, 1]} : vector<64x128xbf16> to vector<16x128xbf16>
    %58 = vector.extract_strided_slice %26 {offsets = [16, 0], sizes = [16, 128], strides = [1, 1]} : vector<64x128xbf16> to vector<16x128xbf16>
    %cst_32 = arith.constant dense<0.000000e+00> : vector<128x128xf32>
    %59 = tpu.matmul %57, %56, %cst_32 {dimension_numbers = #tpu.dot_dimension_numbers<[0], [0], [1], [1], [0, 1, 1, 1], [], []>} : vector<16x128xbf16>, vector<16x128xbf16>, vector<128x128xf32> -> vector<128x128xf32>
    %cst_33 = arith.constant -1.000000e+30 : f32
    %60 = vector.shape_cast %29 : vector<128x1xi1> to vector<128x1xi1>
    %61 = vector.broadcast %60 : vector<128x1xi1> to vector<128x128xi1>
    %62 = vector.broadcast %cst_33 : f32 to vector<128x128xf32>
    %63 = arith.select %61, %59, %62 : vector<128x128xi1>, vector<128x128xf32>
    %cst_34 = arith.constant dense<0xFF800000> : vector<128xf32>
    %64 = vector.multi_reduction <maximumf>, %63, %cst_34 [0] : vector<128x128xf32> to vector<128xf32>
    %65 = vector.shape_cast %64 : vector<128xf32> to vector<1x128xf32>
    %66 = vector.broadcast %65 : vector<1x128xf32> to vector<128x128xf32>
    %67 = arith.subf %63, %66 : vector<128x128xf32>
    %68 = math.exp %67 : vector<128x128xf32>
    %cst_35 = arith.constant dense<0.000000e+00> : vector<128xf32>
    %69 = vector.multi_reduction <add>, %68, %cst_35 [0] : vector<128x128xf32> to vector<128xf32>
    %70 = vector.shape_cast %69 : vector<128xf32> to vector<1x128xf32>
    %71 = arith.truncf %68 : vector<128x128xf32> to vector<128x128xbf16>
    %cst_36 = arith.constant dense<0.000000e+00> : vector<16x128xf32>
    %72 = tpu.matmul %58, %71, %cst_36 {dimension_numbers = #tpu.dot_dimension_numbers<[1], [0], [0], [1], [0, 0, 1, 1], [], []>} : vector<16x128xbf16>, vector<128x128xbf16>, vector<16x128xf32> -> vector<16x128xf32>
    %73 = tpu.reciprocal %70 {approx = true} : vector<1x128xf32> -> vector<1x128xf32>
    %74 = vector.broadcast %73 : vector<1x128xf32> to vector<16x128xf32>
    %75 = arith.mulf %72, %74 : vector<16x128xf32>
    %c1 = arith.constant 1 : index
    %c0_37 = arith.constant 0 : index
    %c0_38 = arith.constant 0 : index
    %76 = vector.load %arg10[%c1, %c0_37, %c0_38] : memref<4x64x16xbf16, #tpu.memory_space<vmem>>, vector<1x64x16xbf16>
    %77 = vector.shape_cast %76 : vector<1x64x16xbf16> to vector<64x16xbf16>
    %78 = arith.truncf %75 : vector<16x128xf32> to vector<16x128xbf16>
    %cst_39 = arith.constant dense<0.000000e+00> : vector<64x128xf32>
    %79 = tpu.matmul %77, %78, %cst_39 {dimension_numbers = #tpu.dot_dimension_numbers<[1], [0], [0], [1], [0, 0, 1, 1], [], []>} : vector<64x16xbf16>, vector<16x128xbf16>, vector<64x128xf32> -> vector<64x128xf32>
    %80 = arith.addf %55, %79 : vector<64x128xf32>
    %81 = vector.extract_strided_slice %14 {offsets = [32, 0], sizes = [16, 128], strides = [1, 1]} : vector<64x128xbf16> to vector<16x128xbf16>
    %82 = vector.extract_strided_slice %20 {offsets = [32, 0], sizes = [16, 128], strides = [1, 1]} : vector<64x128xbf16> to vector<16x128xbf16>
    %83 = vector.extract_strided_slice %26 {offsets = [32, 0], sizes = [16, 128], strides = [1, 1]} : vector<64x128xbf16> to vector<16x128xbf16>
    %cst_40 = arith.constant dense<0.000000e+00> : vector<128x128xf32>
    %84 = tpu.matmul %82, %81, %cst_40 {dimension_numbers = #tpu.dot_dimension_numbers<[0], [0], [1], [1], [0, 1, 1, 1], [], []>} : vector<16x128xbf16>, vector<16x128xbf16>, vector<128x128xf32> -> vector<128x128xf32>
    %cst_41 = arith.constant -1.000000e+30 : f32
    %85 = vector.shape_cast %29 : vector<128x1xi1> to vector<128x1xi1>
    %86 = vector.broadcast %85 : vector<128x1xi1> to vector<128x128xi1>
    %87 = vector.broadcast %cst_41 : f32 to vector<128x128xf32>
    %88 = arith.select %86, %84, %87 : vector<128x128xi1>, vector<128x128xf32>
    %cst_42 = arith.constant dense<0xFF800000> : vector<128xf32>
    %89 = vector.multi_reduction <maximumf>, %88, %cst_42 [0] : vector<128x128xf32> to vector<128xf32>
    %90 = vector.shape_cast %89 : vector<128xf32> to vector<1x128xf32>
    %91 = vector.broadcast %90 : vector<1x128xf32> to vector<128x128xf32>
    %92 = arith.subf %88, %91 : vector<128x128xf32>
    %93 = math.exp %92 : vector<128x128xf32>
    %cst_43 = arith.constant dense<0.000000e+00> : vector<128xf32>
    %94 = vector.multi_reduction <add>, %93, %cst_43 [0] : vector<128x128xf32> to vector<128xf32>
    %95 = vector.shape_cast %94 : vector<128xf32> to vector<1x128xf32>
    %96 = arith.truncf %93 : vector<128x128xf32> to vector<128x128xbf16>
    %cst_44 = arith.constant dense<0.000000e+00> : vector<16x128xf32>
    %97 = tpu.matmul %83, %96, %cst_44 {dimension_numbers = #tpu.dot_dimension_numbers<[1], [0], [0], [1], [0, 0, 1, 1], [], []>} : vector<16x128xbf16>, vector<128x128xbf16>, vector<16x128xf32> -> vector<16x128xf32>
    %98 = tpu.reciprocal %95 {approx = true} : vector<1x128xf32> -> vector<1x128xf32>
    %99 = vector.broadcast %98 : vector<1x128xf32> to vector<16x128xf32>
    %100 = arith.mulf %97, %99 : vector<16x128xf32>
    %c2 = arith.constant 2 : index
    %c0_45 = arith.constant 0 : index
    %c0_46 = arith.constant 0 : index
    %101 = vector.load %arg10[%c2, %c0_45, %c0_46] : memref<4x64x16xbf16, #tpu.memory_space<vmem>>, vector<1x64x16xbf16>
    %102 = vector.shape_cast %101 : vector<1x64x16xbf16> to vector<64x16xbf16>
    %103 = arith.truncf %100 : vector<16x128xf32> to vector<16x128xbf16>
    %cst_47 = arith.constant dense<0.000000e+00> : vector<64x128xf32>
    %104 = tpu.matmul %102, %103, %cst_47 {dimension_numbers = #tpu.dot_dimension_numbers<[1], [0], [0], [1], [0, 0, 1, 1], [], []>} : vector<64x16xbf16>, vector<16x128xbf16>, vector<64x128xf32> -> vector<64x128xf32>
    %105 = arith.addf %80, %104 : vector<64x128xf32>
    %106 = vector.extract_strided_slice %14 {offsets = [48, 0], sizes = [16, 128], strides = [1, 1]} : vector<64x128xbf16> to vector<16x128xbf16>
    %107 = vector.extract_strided_slice %20 {offsets = [48, 0], sizes = [16, 128], strides = [1, 1]} : vector<64x128xbf16> to vector<16x128xbf16>
    %108 = vector.extract_strided_slice %26 {offsets = [48, 0], sizes = [16, 128], strides = [1, 1]} : vector<64x128xbf16> to vector<16x128xbf16>
    %cst_48 = arith.constant dense<0.000000e+00> : vector<128x128xf32>
    %109 = tpu.matmul %107, %106, %cst_48 {dimension_numbers = #tpu.dot_dimension_numbers<[0], [0], [1], [1], [0, 1, 1, 1], [], []>} : vector<16x128xbf16>, vector<16x128xbf16>, vector<128x128xf32> -> vector<128x128xf32>
    %cst_49 = arith.constant -1.000000e+30 : f32
    %110 = vector.shape_cast %29 : vector<128x1xi1> to vector<128x1xi1>
    %111 = vector.broadcast %110 : vector<128x1xi1> to vector<128x128xi1>
    %112 = vector.broadcast %cst_49 : f32 to vector<128x128xf32>
    %113 = arith.select %111, %109, %112 : vector<128x128xi1>, vector<128x128xf32>
    %cst_50 = arith.constant dense<0xFF800000> : vector<128xf32>
    %114 = vector.multi_reduction <maximumf>, %113, %cst_50 [0] : vector<128x128xf32> to vector<128xf32>
    %115 = vector.shape_cast %114 : vector<128xf32> to vector<1x128xf32>
    %116 = vector.broadcast %115 : vector<1x128xf32> to vector<128x128xf32>
    %117 = arith.subf %113, %116 : vector<128x128xf32>
    %118 = math.exp %117 : vector<128x128xf32>
    %cst_51 = arith.constant dense<0.000000e+00> : vector<128xf32>
    %119 = vector.multi_reduction <add>, %118, %cst_51 [0] : vector<128x128xf32> to vector<128xf32>
    %120 = vector.shape_cast %119 : vector<128xf32> to vector<1x128xf32>
    %121 = arith.truncf %118 : vector<128x128xf32> to vector<128x128xbf16>
    %cst_52 = arith.constant dense<0.000000e+00> : vector<16x128xf32>
    %122 = tpu.matmul %108, %121, %cst_52 {dimension_numbers = #tpu.dot_dimension_numbers<[1], [0], [0], [1], [0, 0, 1, 1], [], []>} : vector<16x128xbf16>, vector<128x128xbf16>, vector<16x128xf32> -> vector<16x128xf32>
    %123 = tpu.reciprocal %120 {approx = true} : vector<1x128xf32> -> vector<1x128xf32>
    %124 = vector.broadcast %123 : vector<1x128xf32> to vector<16x128xf32>
    %125 = arith.mulf %122, %124 : vector<16x128xf32>
    %c3 = arith.constant 3 : index
    %c0_53 = arith.constant 0 : index
    %c0_54 = arith.constant 0 : index
    %126 = vector.load %arg10[%c3, %c0_53, %c0_54] : memref<4x64x16xbf16, #tpu.memory_space<vmem>>, vector<1x64x16xbf16>
    %127 = vector.shape_cast %126 : vector<1x64x16xbf16> to vector<64x16xbf16>
    %128 = arith.truncf %125 : vector<16x128xf32> to vector<16x128xbf16>
    %cst_55 = arith.constant dense<0.000000e+00> : vector<64x128xf32>
    %129 = tpu.matmul %127, %128, %cst_55 {dimension_numbers = #tpu.dot_dimension_numbers<[1], [0], [0], [1], [0, 0, 1, 1], [], []>} : vector<64x16xbf16>, vector<16x128xbf16>, vector<64x128xf32> -> vector<64x128xf32>
    %130 = arith.addf %105, %129 : vector<64x128xf32>
    %c0_56 = arith.constant 0 : index
    %c0_57 = arith.constant 0 : index
    %131 = vector.load %arg11[%c0_56, %c0_57] : memref<64x1xf32, #tpu.memory_space<vmem>>, vector<64x1xf32>
    %132 = vector.broadcast %131 : vector<64x1xf32> to vector<64x128xf32>
    %133 = arith.addf %130, %132 : vector<64x128xf32>
    %c0_58 = arith.constant 0 : index
    %c0_59 = arith.constant 0 : index
    %c0_60 = arith.constant 0 : index
    %134 = vector.load %arg12[%c0_58, %c0_59, %c0_60] : memref<1x64x128xf32, #tpu.memory_space<vmem>>, vector<1x64x128xf32>
    %135 = vector.shape_cast %134 : vector<1x64x128xf32> to vector<64x128xf32>
    %136 = vector.shape_cast %133 : vector<64x128xf32> to vector<1x64x128xf32>
    tpu.vector_store %arg12[%c0_58, %c0_59, %c0_60], %136 {strides = array<i32>} : memref<1x64x128xf32, #tpu.memory_space<vmem>>, vector<1x64x128xf32>,
    return
  }
  func.func @transform_0(%arg0: i32) -> (i32, i32, i32) {
    %c0_i32 = arith.constant 0 : i32
    %c0_i32_0 = arith.constant 0 : i32
    %c0_i32_1 = arith.constant 0 : i32
    return %arg0, %c0_i32, %c0_i32_0 : i32, i32, i32
  }
  func.func @transform_1(%arg0: i32) -> (i32, i32, i32) {
    %c0_i32 = arith.constant 0 : i32
    %c0_i32_0 = arith.constant 0 : i32
    %c0_i32_1 = arith.constant 0 : i32
    return %arg0, %c0_i32, %c0_i32_0 : i32, i32, i32
  }
  func.func @transform_2(%arg0: i32) -> (i32, i32, i32) {
    %c0_i32 = arith.constant 0 : i32
    %c0_i32_0 = arith.constant 0 : i32
    %c0_i32_1 = arith.constant 0 : i32
    return %arg0, %c0_i32, %c0_i32_0 : i32, i32, i32
  }
  func.func @transform_3(%arg0: i32) -> (i32, i32) {
    %c0_i32 = arith.constant 0 : i32
    %c0_i32_0 = arith.constant 0 : i32
    %c0_i32_1 = arith.constant 0 : i32
    return %c0_i32, %c0_i32_0 : i32, i32
  }
  func.func @transform_4(%arg0: i32) -> (i32, i32) {
    %c0_i32 = arith.constant 0 : i32
    %c0_i32_0 = arith.constant 0 : i32
    %c0_i32_1 = arith.constant 0 : i32
    return %c0_i32, %c0_i32_0 : i32, i32
  }
  func.func @transform_5(%arg0: i32) -> (i32, i32) {
    %c0_i32 = arith.constant 0 : i32
    %c0_i32_0 = arith.constant 0 : i32
    %c0_i32_1 = arith.constant 0 : i32
    return %c0_i32, %c0_i32_0 : i32, i32
  }
  func.func @transform_6(%arg0: i32) -> (i32, i32) {
    %c0_i32 = arith.constant 0 : i32
    %c0_i32_0 = arith.constant 0 : i32
    %c0_i32_1 = arith.constant 0 : i32
    return %c0_i32, %c0_i32_0 : i32, i32
  }
  func.func @transform_7(%arg0: i32) -> (i32, i32) {
    %c0_i32 = arith.constant 0 : i32
    %c0_i32_0 = arith.constant 0 : i32
    %c0_i32_1 = arith.constant 0 : i32
    return %c0_i32, %c0_i32_0 : i32, i32
  }
  func.func @transform_8(%arg0: i32) -> (i32, i32) {
    %c0_i32 = arith.constant 0 : i32
    %c0_i32_0 = arith.constant 0 : i32
    %c0_i32_1 = arith.constant 0 : i32
    return %c0_i32, %c0_i32_0 : i32, i32
  }
  func.func @transform_9(%arg0: i32) -> (i32, i32, i32) {
    %c0_i32 = arith.constant 0 : i32
    %c0_i32_0 = arith.constant 0 : i32
    %c0_i32_1 = arith.constant 0 : i32
    %c0_i32_2 = arith.constant 0 : i32
    return %c0_i32, %c0_i32_0, %c0_i32_1 : i32, i32, i32
  }
  func.func @transform_10(%arg0: i32) -> (i32, i32) {
    %c0_i32 = arith.constant 0 : i32
    %c0_i32_0 = arith.constant 0 : i32
    %c0_i32_1 = arith.constant 0 : i32
    return %c0_i32, %c0_i32_0 : i32, i32
  }
  func.func @transform_11(%arg0: i32) -> (i32, i32, i32) {
    %c0_i32 = arith.constant 0 : i32
    %c0_i32_0 = arith.constant 0 : i32
    %c0_i32_1 = arith.constant 0 : i32
    return %arg0, %c0_i32, %c0_i32_0 : i32, i32, i32
  }
}

</mosaic_0001>

<llo_original>
// kernel: tpu_custom_call.1
$region0: #{tpu_custom_call.1}
  #allocation0 [shape = 'u32[]', space=smem, size = 0x4, offset = 0x4, fixed_abs, tag = 'smem constant byte address 0x4 - core index']
  #allocation1 [shape = 'u32[144,128]{1,0:T(1,128)}', space=vmem, size = 0x12000, scoped, tag = 'internal scratch']
  %s0 = inlined_call_operand.vmem [shape: f32[2,64,128], index: 0, kind: input, shape index: {}]
  %s1 = inlined_call_operand.vmem [shape: f32[2,64,128], index: 1, kind: input, shape index: {}]
  %s2 = inlined_call_operand.vmem [shape: f32[2,64,128], index: 2, kind: input, shape index: {}]
  %s3 = inlined_call_operand.hbm [shape: bf16[64,64], index: 3, kind: input, shape index: {}]
  %s4 = inlined_call_operand.vmem [shape: f32[64,1], index: 4, kind: input, shape index: {}]
  %s5 = inlined_call_operand.hbm [shape: bf16[64,64], index: 5, kind: input, shape index: {}]
  %s6 = inlined_call_operand.vmem [shape: f32[64,1], index: 6, kind: input, shape index: {}]
  %s7 = inlined_call_operand.hbm [shape: bf16[64,64], index: 7, kind: input, shape index: {}]
  %s8 = inlined_call_operand.vmem [shape: f32[64,1], index: 8, kind: input, shape index: {}]
  %s9 = inlined_call_operand.vmem [shape: bf16[4,64,16], index: 9, kind: input, shape index: {}]
  %s10 = inlined_call_operand.vmem [shape: f32[64,1], index: 10, kind: input, shape index: {}]
  %s11 = inlined_call_operand.hbm [shape: f32[2,64,128], index: 11, kind: output, shape index: {}]
  %s12 = sld [smem:[#allocation0]]
  $region89: #{tpu_custom_call.1} parent=0
    _
  %s14 = ssub.s32 1, %s12
  %s15 = scalar_select 0, %s14, %s12
  $region1: #{tpu_custom_call.1} parent=0
    #allocation2 [shape = 'u8[16384]{0}', space=vmem, size = 0x4000, scoped, tag = 'input window, operand 3, single buffered']
    #allocation3 [shape = 's32[2]{0}', space=sflag, size = 0x8, scoped, tag = 'scoped memory for tpu_custom_call.1']
    #allocation4 [shape = 's32[2]{0}', space=sflag, size = 0x8, scoped, tag = 'scoped memory for tpu_custom_call.1']
    #allocation5 [shape = 'u8[16384]{0}', space=vmem, size = 0x4000, scoped, tag = 'input window, operand 5, single buffered']
    #allocation6 [shape = 's32[1]{0}', space=sflag, size = 0x4, scoped, tag = 'scoped memory for tpu_custom_call.1']
    #allocation7 [shape = 'u8[16384]{0}', space=vmem, size = 0x4000, scoped, tag = 'input window, operand 7, single buffered']
    #allocation8 [shape = 'u8[65536]{0}', space=vmem, size = 0x10000, scoped, tag = 'output window, operand 0']
    %16 = vsyncpa [#allocation3], 0
    %17 = vsyncpa [#allocation6], 0
    %18 = vsyncpa [#allocation4], 0
    %s19 = scalar_lea.sflag [#allocation4], 1
    %20 = vsyncpa %s19, 0
    loop: start=0, step=1, limit=4
    $region2: #{tpu_custom_call.1} parent=1 // loop_pre_header
      _
    $region3: #{tpu_custom_call.1} parent=1 // loop_header
      %s22 = sphi 0, %s26
      %p23 = scmp.ge.s32.totalorder %s22, 4
      %s32 = sphi 0, %s34
      %s35 = sphi 0, %s32
      %s36 = sphi 0, %s35
      %s52 = sphi 0, %s36
      %s58 = sphi 0, %s60
      %s61 = sphi 0, %s58
      %s62 = sphi 0, %s61
      %s78 = sphi 0, %s62
      %s84 = sphi 0, %s86
      %s87 = sphi 0, %s84
      %s88 = sphi 0, %s87
      %s104 = sphi 0, %s88
      %s108 = sphi 0, %s108
      %s110 = sphi 0, %s108
      %s111 = sphi 0, %s110
      %s125 = sphi 0, %s111
      %s129 = sphi 0, %s129
      %s131 = sphi 0, %s129
      %s132 = sphi 0, %s131
      %s146 = sphi 0, %s132
      %s150 = sphi 0, %s150
      %s152 = sphi 0, %s150
      %s153 = sphi 0, %s152
      %s167 = sphi 0, %s153
      %s171 = sphi 0, %s171
      %s173 = sphi 0, %s171
      %s174 = sphi 0, %s173
      %s188 = sphi 0, %s174
      %s192 = sphi 0, %s192
      %s194 = sphi 0, %s192
      %s195 = sphi 0, %s194
      %s209 = sphi 0, %s195
      %s213 = sphi 0, %s213
      %s215 = sphi 0, %s213
      %s216 = sphi 0, %s215
      %s230 = sphi 0, %s216
      %s234 = sphi 0, %s234
      %s236 = sphi 0, %s234
      %s237 = sphi 0, %s236
      %s251 = sphi 0, %s237
      %s255 = sphi 0, %s255
      %s257 = sphi 0, %s255
      %s258 = sphi 0, %s257
      %s272 = sphi 0, %s258
      %s278 = sphi 0, %s280
      %s281 = sphi 0, %s278
      %s282 = sphi 0, %s281
      %s298 = sphi 0, %s282
    $region4: #{tpu_custom_call.1} parent=1 // loop_header_branch
      %25 = sbr.rel (%p23) target = $region8
    $region5: #{tpu_custom_call.1} parent=1 // loop_body
      %s27 = ssub.s32 %s22, 1
      %s28 = ssub.s32 %s22, 2
      %s29 = sadd.s32 %s22, 1
      %s30 = ssub.s32 %s22, %s29
      %p31 = scmp.eq.s32.totalorder %s30, 0
      %s33 = sadd.s32 %s32, 1
      %s34 = scalar_select %p31, %s32, %s33
      %p37 = pneg %p31
      %p38 = scmp.eq.s32.totalorder %s22, 1
      %p39 = por %p37, %p38
      %p40 = scmp.ne.s32.totalorder %s32, %s35
      %p41 = scmp.eq.s32.totalorder %s22, 0
      %p42 = por %p40, %p41
      %p43 = scmp.ne.s32.totalorder %s32, %s35
      %p44 = scmp.eq.s32.totalorder %s27, 1
      %p45 = por %p43, %p44
      %p46 = scmp.ne.s32.totalorder %s35, %s36
      %p47 = scmp.eq.s32.totalorder %s27, 0
      %p48 = por %p46, %p47
      %p49 = scmp.ne.s32.totalorder %s35, %s36
      %p50 = scmp.eq.s32.totalorder %s28, 1
      %p51 = por %p49, %p50
      %p53 = scmp.ne.s32.totalorder %s36, %s52
      %p54 = scmp.eq.s32.totalorder %s28, 0
      %p55 = por %p53, %p54
      %s56 = ssub.s32 %s22, %s29
      %p57 = scmp.eq.s32.totalorder %s56, 0
      %s59 = sadd.s32 %s58, 1
      %s60 = scalar_select %p57, %s58, %s59
      %p63 = pneg %p57
      %p64 = scmp.eq.s32.totalorder %s22, 1
      %p65 = por %p63, %p64
      %p66 = scmp.ne.s32.totalorder %s58, %s61
      %p67 = scmp.eq.s32.totalorder %s22, 0
      %p68 = por %p66, %p67
      %p69 = scmp.ne.s32.totalorder %s58, %s61
      %p70 = scmp.eq.s32.totalorder %s27, 1
      %p71 = por %p69, %p70
      %p72 = scmp.ne.s32.totalorder %s61, %s62
      %p73 = scmp.eq.s32.totalorder %s27, 0
      %p74 = por %p72, %p73
      %p75 = scmp.ne.s32.totalorder %s61, %s62
      %p76 = scmp.eq.s32.totalorder %s28, 1
      %p77 = por %p75, %p76
      %p79 = scmp.ne.s32.totalorder %s62, %s78
      %p80 = scmp.eq.s32.totalorder %s28, 0
      %p81 = por %p79, %p80
      %s82 = ssub.s32 %s22, %s29
      %p83 = scmp.eq.s32.totalorder %s82, 0
      %s85 = sadd.s32 %s84, 1
      %s86 = scalar_select %p83, %s84, %s85
      %p89 = pneg %p83
      %p90 = scmp.eq.s32.totalorder %s22, 1
      %p91 = por %p89, %p90
      %p92 = scmp.ne.s32.totalorder %s84, %s87
      %p93 = scmp.eq.s32.totalorder %s22, 0
      %p94 = por %p92, %p93
      %p95 = scmp.ne.s32.totalorder %s84, %s87
      %p96 = scmp.eq.s32.totalorder %s27, 1
      %p97 = por %p95, %p96
      %p98 = scmp.ne.s32.totalorder %s87, %s88
      %p99 = scmp.eq.s32.totalorder %s27, 0
      %p100 = por %p98, %p99
      %p101 = scmp.ne.s32.totalorder %s87, %s88
      %p102 = scmp.eq.s32.totalorder %s28, 1
      %p103 = por %p101, %p102
      %p105 = scmp.ne.s32.totalorder %s88, %s104
      %p106 = scmp.eq.s32.totalorder %s28, 0
      %p107 = por %p105, %p106
      %s109 = sadd.s32 %s108, 1
      %p112 = scmp.eq.s32.totalorder %s22, 1
      %p113 = scmp.ne.s32.totalorder %s108, %s110
      %p114 = scmp.eq.s32.totalorder %s22, 0
      %p115 = por %p113, %p114
      %p116 = scmp.ne.s32.totalorder %s108, %s110
      %p117 = scmp.eq.s32.totalorder %s27, 1
      %p118 = por %p116, %p117
      %p119 = scmp.ne.s32.totalorder %s110, %s111
      %p120 = scmp.eq.s32.totalorder %s27, 0
      %p121 = por %p119, %p120
      %p122 = scmp.ne.s32.totalorder %s110, %s111
      %p123 = scmp.eq.s32.totalorder %s28, 1
      %p124 = por %p122, %p123
      %p126 = scmp.ne.s32.totalorder %s111, %s125
      %p127 = scmp.eq.s32.totalorder %s28, 0
      %p128 = por %p126, %p127
      %s130 = sadd.s32 %s129, 1
      %p133 = scmp.eq.s32.totalorder %s22, 1
      %p134 = scmp.ne.s32.totalorder %s129, %s131
      %p135 = scmp.eq.s32.totalorder %s22, 0
      %p136 = por %p134, %p135
      %p137 = scmp.ne.s32.totalorder %s129, %s131
      %p138 = scmp.eq.s32.totalorder %s27, 1
      %p139 = por %p137, %p138
      %p140 = scmp.ne.s32.totalorder %s131, %s132
      %p141 = scmp.eq.s32.totalorder %s27, 0
      %p142 = por %p140, %p141
      %p143 = scmp.ne.s32.totalorder %s131, %s132
      %p144 = scmp.eq.s32.totalorder %s28, 1
      %p145 = por %p143, %p144
      %p147 = scmp.ne.s32.totalorder %s132, %s146
      %p148 = scmp.eq.s32.totalorder %s28, 0
      %p149 = por %p147, %p148
      %s151 = sadd.s32 %s150, 1
      %p154 = scmp.eq.s32.totalorder %s22, 1
      %p155 = scmp.ne.s32.totalorder %s150, %s152
      %p156 = scmp.eq.s32.totalorder %s22, 0
      %p157 = por %p155, %p156
      %p158 = scmp.ne.s32.totalorder %s150, %s152
      %p159 = scmp.eq.s32.totalorder %s27, 1
      %p160 = por %p158, %p159
      %p161 = scmp.ne.s32.totalorder %s152, %s153
      %p162 = scmp.eq.s32.totalorder %s27, 0
      %p163 = por %p161, %p162
      %p164 = scmp.ne.s32.totalorder %s152, %s153
      %p165 = scmp.eq.s32.totalorder %s28, 1
      %p166 = por %p164, %p165
      %p168 = scmp.ne.s32.totalorder %s153, %s167
      %p169 = scmp.eq.s32.totalorder %s28, 0
      %p170 = por %p168, %p169
      %s172 = sadd.s32 %s171, 1
      %p175 = scmp.eq.s32.totalorder %s22, 1
      %p176 = scmp.ne.s32.totalorder %s171, %s173
      %p177 = scmp.eq.s32.totalorder %s22, 0
      %p178 = por %p176, %p177
      %p179 = scmp.ne.s32.totalorder %s171, %s173
      %p180 = scmp.eq.s32.totalorder %s27, 1
      %p181 = por %p179, %p180
      %p182 = scmp.ne.s32.totalorder %s173, %s174
      %p183 = scmp.eq.s32.totalorder %s27, 0
      %p184 = por %p182, %p183
      %p185 = scmp.ne.s32.totalorder %s173, %s174
      %p186 = scmp.eq.s32.totalorder %s28, 1
      %p187 = por %p185, %p186
      %p189 = scmp.ne.s32.totalorder %s174, %s188
      %p190 = scmp.eq.s32.totalorder %s28, 0
      %p191 = por %p189, %p190
      %s193 = sadd.s32 %s192, 1
      %p196 = scmp.eq.s32.totalorder %s22, 1
      %p197 = scmp.ne.s32.totalorder %s192, %s194
      %p198 = scmp.eq.s32.totalorder %s22, 0
      %p199 = por %p197, %p198
      %p200 = scmp.ne.s32.totalorder %s192, %s194
      %p201 = scmp.eq.s32.totalorder %s27, 1
      %p202 = por %p200, %p201
      %p203 = scmp.ne.s32.totalorder %s194, %s195
      %p204 = scmp.eq.s32.totalorder %s27, 0
      %p205 = por %p203, %p204
      %p206 = scmp.ne.s32.totalorder %s194, %s195
      %p207 = scmp.eq.s32.totalorder %s28, 1
      %p208 = por %p206, %p207
      %p210 = scmp.ne.s32.totalorder %s195, %s209
      %p211 = scmp.eq.s32.totalorder %s28, 0
      %p212 = por %p210, %p211
      %s214 = sadd.s32 %s213, 1
      %p217 = scmp.eq.s32.totalorder %s22, 1
      %p218 = scmp.ne.s32.totalorder %s213, %s215
      %p219 = scmp.eq.s32.totalorder %s22, 0
      %p220 = por %p218, %p219
      %p221 = scmp.ne.s32.totalorder %s213, %s215
      %p222 = scmp.eq.s32.totalorder %s27, 1
      %p223 = por %p221, %p222
      %p224 = scmp.ne.s32.totalorder %s215, %s216
      %p225 = scmp.eq.s32.totalorder %s27, 0
      %p226 = por %p224, %p225
      %p227 = scmp.ne.s32.totalorder %s215, %s216
      %p228 = scmp.eq.s32.totalorder %s28, 1
      %p229 = por %p227, %p228
      %p231 = scmp.ne.s32.totalorder %s216, %s230
      %p232 = scmp.eq.s32.totalorder %s28, 0
      %p233 = por %p231, %p232
      %s235 = sadd.s32 %s234, 1
      %p238 = scmp.eq.s32.totalorder %s22, 1
      %p239 = scmp.ne.s32.totalorder %s234, %s236
      %p240 = scmp.eq.s32.totalorder %s22, 0
      %p241 = por %p239, %p240
      %p242 = scmp.ne.s32.totalorder %s234, %s236
      %p243 = scmp.eq.s32.totalorder %s27, 1
      %p244 = por %p242, %p243
      %p245 = scmp.ne.s32.totalorder %s236, %s237
      %p246 = scmp.eq.s32.totalorder %s27, 0
      %p247 = por %p245, %p246
      %p248 = scmp.ne.s32.totalorder %s236, %s237
      %p249 = scmp.eq.s32.totalorder %s28, 1
      %p250 = por %p248, %p249
      %p252 = scmp.ne.s32.totalorder %s237, %s251
      %p253 = scmp.eq.s32.totalorder %s28, 0
      %p254 = por %p252, %p253
      %s256 = sadd.s32 %s255, 1
      %p259 = scmp.eq.s32.totalorder %s22, 1
      %p260 = scmp.ne.s32.totalorder %s255, %s257
      %p261 = scmp.eq.s32.totalorder %s22, 0
      %p262 = por %p260, %p261
      %p263 = scmp.ne.s32.totalorder %s255, %s257
      %p264 = scmp.eq.s32.totalorder %s27, 1
      %p265 = por %p263, %p264
      %p266 = scmp.ne.s32.totalorder %s257, %s258
      %p267 = scmp.eq.s32.totalorder %s27, 0
      %p268 = por %p266, %p267
      %p269 = scmp.ne.s32.totalorder %s257, %s258
      %p270 = scmp.eq.s32.totalorder %s28, 1
      %p271 = por %p269, %p270
      %p273 = scmp.ne.s32.totalorder %s258, %s272
      %p274 = scmp.eq.s32.totalorder %s28, 0
      %p275 = por %p273, %p274
      %s276 = ssub.s32 %s22, %s29
      %p277 = scmp.eq.s32.totalorder %s276, 0
      %s279 = sadd.s32 %s278, 1
      %s280 = scalar_select %p277, %s278, %s279
      %p283 = pneg %p277
      %p284 = scmp.eq.s32.totalorder %s22, 1
      %p285 = por %p283, %p284
      %p286 = scmp.ne.s32.totalorder %s278, %s281
      %p287 = scmp.eq.s32.totalorder %s22, 0
      %p288 = por %p286, %p287
      %p289 = scmp.ne.s32.totalorder %s278, %s281
      %p290 = scmp.eq.s32.totalorder %s27, 1
      %p291 = por %p289, %p290
      %p292 = scmp.ne.s32.totalorder %s281, %s282
      %p293 = scmp.eq.s32.totalorder %s27, 0
      %p294 = por %p292, %p293
      %p295 = scmp.ne.s32.totalorder %s281, %s282
      %p296 = scmp.eq.s32.totalorder %s28, 1
      %p297 = por %p295, %p296
      %p299 = scmp.ne.s32.totalorder %s282, %s298
      %p300 = scmp.eq.s32.totalorder %s28, 0
      %p301 = por %p299, %p300
      %p302 = scmp.le.s32.totalorder 1, %s22
      %p303 = scmp.lt.s32.totalorder %s22, 3
      %p304 = pnand %p302, %p303
      %p305 = pneg %p304
      // Predicated region
      $region9: #{tpu_custom_call.1} parent=5 // pred_check
        _
      $region10: #{tpu_custom_call.1} parent=5 // pred_check_branch
        %307 = sbr.rel (%p304) target = $region12
      $region11: #{tpu_custom_call.1} parent=5 // pred_region
        %s308 = ssub.s32 %s22, 1
        // Predicated region
        $region13: #{tpu_custom_call.1} parent=11 // pred_check
          %p309 = pneg %p121
        $region14: #{tpu_custom_call.1} parent=11 // pred_check_branch
          %311 = sbr.rel (%p309) target = $region16
        $region15: #{tpu_custom_call.1} parent=11 // pred_region
          %s313 = ssub.s32 512, 512
          %314 = vsyncadd [#allocation3], %s313
          %s315 = sshll.u32 [#allocation2], 4
          %s316 = int_to_ptr.vmem [resolvable:$true] %s315
          %321 = dma.hbm_to_vmem [thread:$0]  %s3, 512, %s316, [#allocation3], 64, 64, 4
        $region16: #{tpu_custom_call.1} parent=11 // pred_fallthru
          _
        // Predicated region
        $region17: #{tpu_custom_call.1} parent=11 // pred_check
          %p322 = pneg %p142
        $region18: #{tpu_custom_call.1} parent=11 // pred_check_branch
          %324 = sbr.rel (%p322) target = $region20
        $region19: #{tpu_custom_call.1} parent=11 // pred_region
          _
        $region20: #{tpu_custom_call.1} parent=11 // pred_fallthru
          _
        // Predicated region
        $region21: #{tpu_custom_call.1} parent=11 // pred_check
          %p325 = pneg %p163
        $region22: #{tpu_custom_call.1} parent=11 // pred_check_branch
          %327 = sbr.rel (%p325) target = $region24
        $region23: #{tpu_custom_call.1} parent=11 // pred_region
          %s329 = ssub.s32 512, 512
          %330 = vsyncadd [#allocation6], %s329
          %s331 = sshll.u32 [#allocation5], 4
          %s332 = int_to_ptr.vmem [resolvable:$true] %s331
          %337 = dma.hbm_to_vmem [thread:$0]  %s5, 512, %s332, [#allocation6], 64, 64, 4
        $region24: #{tpu_custom_call.1} parent=11 // pred_fallthru
          _
        // Predicated region
        $region25: #{tpu_custom_call.1} parent=11 // pred_check
          %p338 = pneg %p184
        $region26: #{tpu_custom_call.1} parent=11 // pred_check_branch
          %340 = sbr.rel (%p338) target = $region28
        $region27: #{tpu_custom_call.1} parent=11 // pred_region
          _
        $region28: #{tpu_custom_call.1} parent=11 // pred_fallthru
          _
        // Predicated region
        $region29: #{tpu_custom_call.1} parent=11 // pred_check
          %p341 = pneg %p205
        $region30: #{tpu_custom_call.1} parent=11 // pred_check_branch
          %343 = sbr.rel (%p341) target = $region32
        $region31: #{tpu_custom_call.1} parent=11 // pred_region
          %s345 = ssub.s32 512, 512
          %346 = vsyncadd [#allocation6], %s345
          %s347 = sshll.u32 [#allocation7], 4
          %s348 = int_to_ptr.vmem [resolvable:$true] %s347
          %353 = dma.hbm_to_vmem [thread:$0]  %s7, 512, %s348, [#allocation6], 64, 64, 4
        $region32: #{tpu_custom_call.1} parent=11 // pred_fallthru
          _
        // Predicated region
        $region33: #{tpu_custom_call.1} parent=11 // pred_check
          %p354 = pneg %p226
        $region34: #{tpu_custom_call.1} parent=11 // pred_check_branch
          %356 = sbr.rel (%p354) target = $region36
        $region35: #{tpu_custom_call.1} parent=11 // pred_region
          _
        $region36: #{tpu_custom_call.1} parent=11 // pred_fallthru
          _
        // Predicated region
        $region37: #{tpu_custom_call.1} parent=11 // pred_check
          %p357 = pneg %p247
        $region38: #{tpu_custom_call.1} parent=11 // pred_check_branch
          %359 = sbr.rel (%p357) target = $region40
        $region39: #{tpu_custom_call.1} parent=11 // pred_region
          _
        $region40: #{tpu_custom_call.1} parent=11 // pred_fallthru
          _
        // Predicated region
        $region41: #{tpu_custom_call.1} parent=11 // pred_check
          %p360 = pneg %p268
        $region42: #{tpu_custom_call.1} parent=11 // pred_check_branch
          %362 = sbr.rel (%p360) target = $region44
        $region43: #{tpu_custom_call.1} parent=11 // pred_region
          _
        $region44: #{tpu_custom_call.1} parent=11 // pred_fallthru
          _
      $region12: #{tpu_custom_call.1} parent=5 // pred_fallthru
        _
      %p363 = scmp.lt.s32.totalorder %s22, 2
      // Predicated region
      $region45: #{tpu_custom_call.1} parent=5 // pred_check
        %p364 = pneg %p363
      $region46: #{tpu_custom_call.1} parent=5 // pred_check_branch
        %366 = sbr.rel (%p364) target = $region48
      $region47: #{tpu_custom_call.1} parent=5 // pred_region
        // Predicated region
        $region49: #{tpu_custom_call.1} parent=47 // pred_check
          %p367 = pneg %p42
        $region50: #{tpu_custom_call.1} parent=47 // pred_check_branch
          %369 = sbr.rel (%p367) target = $region52
        $region51: #{tpu_custom_call.1} parent=47 // pred_region
          %p370 = scmp.lt.s32.totalorder %s22, 1
          %s371 = scalar_select %p370, %s22, 1
          %s372 = smul.addr %s371, 8
          %s373 = smul.addr %s372, 8
          %s374 = scalar_lea.vmem %s0, %s373
        $region52: #{tpu_custom_call.1} parent=47 // pred_fallthru
          _
        // Predicated region
        $region53: #{tpu_custom_call.1} parent=47 // pred_check
          %p375 = pneg %p68
        $region54: #{tpu_custom_call.1} parent=47 // pred_check_branch
          %377 = sbr.rel (%p375) target = $region56
        $region55: #{tpu_custom_call.1} parent=47 // pred_region
          %p378 = scmp.lt.s32.totalorder %s22, 1
          %s379 = scalar_select %p378, %s22, 1
          %s380 = smul.addr %s379, 8
          %s381 = smul.addr %s380, 8
          %s382 = scalar_lea.vmem %s1, %s381
        $region56: #{tpu_custom_call.1} parent=47 // pred_fallthru
          _
        // Predicated region
        $region57: #{tpu_custom_call.1} parent=47 // pred_check
          %p383 = pneg %p94
        $region58: #{tpu_custom_call.1} parent=47 // pred_check_branch
          %385 = sbr.rel (%p383) target = $region60
        $region59: #{tpu_custom_call.1} parent=47 // pred_region
          %p386 = scmp.lt.s32.totalorder %s22, 1
          %s387 = scalar_select %p386, %s22, 1
          %s388 = smul.addr %s387, 8
          %s389 = smul.addr %s388, 8
          %s390 = scalar_lea.vmem %s2, %s389
        $region60: #{tpu_custom_call.1} parent=47 // pred_fallthru
          _
      $region48: #{tpu_custom_call.1} parent=5 // pred_fallthru
        _
      %p391 = scmp.le.s32.totalorder 1, %s22
      %p392 = scmp.lt.s32.totalorder %s22, 3
      %p393 = pnand %p391, %p392
      %p394 = pneg %p393
      // Predicated region
      $region61: #{tpu_custom_call.1} parent=5 // pred_check
        _
      $region62: #{tpu_custom_call.1} parent=5 // pred_check_branch
        %396 = sbr.rel (%p393) target = $region64
      $region63: #{tpu_custom_call.1} parent=5 // pred_region
        %s397 = ssub.s32 %s22, 1
        // Predicated region
        $region65: #{tpu_custom_call.1} parent=63 // pred_check
          %p398 = pneg %p121
        $region66: #{tpu_custom_call.1} parent=63 // pred_check_branch
          %400 = sbr.rel (%p398) target = $region68
        $region67: #{tpu_custom_call.1} parent=63 // pred_region
          %401 = dma.done [#allocation3], 512
        $region68: #{tpu_custom_call.1} parent=63 // pred_fallthru
          _
        // Predicated region
        $region69: #{tpu_custom_call.1} parent=63 // pred_check
          %p402 = pneg %p163
        $region70: #{tpu_custom_call.1} parent=63 // pred_check_branch
          %404 = sbr.rel (%p402) target = $region72
        $region71: #{tpu_custom_call.1} parent=63 // pred_region
          %405 = dma.done [#allocation6], 512
        $region72: #{tpu_custom_call.1} parent=63 // pred_fallthru
          _
        // Predicated region
        $region73: #{tpu_custom_call.1} parent=63 // pred_check
          %p406 = pneg %p205
        $region74: #{tpu_custom_call.1} parent=63 // pred_check_branch
          %408 = sbr.rel (%p406) target = $region76
        $region75: #{tpu_custom_call.1} parent=63 // pred_region
          %409 = dma.done [#allocation6], 512
        $region76: #{tpu_custom_call.1} parent=63 // pred_fallthru
          _
        %p410 = scmp.lt.s32.totalorder %s27, 1
        %s411 = scalar_select %p410, %s27, 1
        %s412 = smul.addr %s411, 8
        %s413 = smul.addr %s412, 8
        %s414 = scalar_lea.vmem %s0, %s413
        %p415 = pneg %p48
        %p416 = pneg %p45
        %p417 = scmp.lt.s32.totalorder %s27, 1
        %s418 = scalar_select %p417, %s27, 1
        %s419 = smul.addr %s418, 8
        %s420 = smul.addr %s419, 8
        %s421 = scalar_lea.vmem %s1, %s420
        %p422 = pneg %p74
        %p423 = pneg %p71
        %p424 = scmp.lt.s32.totalorder %s27, 1
        %s425 = scalar_select %p424, %s27, 1
        %s426 = smul.addr %s425, 8
        %s427 = smul.addr %s426, 8
        %s428 = scalar_lea.vmem %s2, %s427
        %p429 = pneg %p100
        %p430 = pneg %p97
        %p431 = pneg %p121
        %p432 = pneg %p118
        %p433 = pneg %p142
        %p434 = pneg %p139
        %p435 = pneg %p163
        %p436 = pneg %p160
        %p437 = pneg %p184
        %p438 = pneg %p181
        %p439 = pneg %p205
        %p440 = pneg %p202
        %p441 = pneg %p226
        %p442 = pneg %p223
        %p443 = pneg %p247
        %p444 = pneg %p244
        %p445 = pneg %p268
        %p446 = pneg %p265
        %p447 = pneg %p294
        %p448 = pneg %p291
        %s449 = sand.u32 %s281, 1
        %s450 = scalar_lea.sflag [#allocation4], %s449
        %s451 = sand.u32 %s281, 1
        %s452 = smul.addr %s451, 64
        %s453 = scalar_lea.vmem [#allocation8], %s452
        %p454 = scmp.lt.s32.totalorder %s27, 1
        %s455 = scalar_select %p454, %s27, 1
        %s456 = smul.addr %s455, 8
        %s457 = smul.addr %s456, 8
        %s458 = scalar_lea.vmem %s0, %s457
        %p459 = scmp.lt.s32.totalorder %s27, 1
        %s460 = scalar_select %p459, %s27, 1
        %s461 = smul.addr %s460, 8
        %s462 = smul.addr %s461, 8
        %s463 = scalar_lea.vmem %s1, %s462
        %p464 = scmp.lt.s32.totalorder %s27, 1
        %s465 = scalar_select %p464, %s27, 1
        %s466 = smul.addr %s465, 8
        %s467 = smul.addr %s466, 8
        %s468 = scalar_lea.vmem %s2, %s467
        %v470 = vld [vmem:[%s458] sm:$0xff]
        %v471 = vld [vmem:[%s458 + $0x8] sm:$0xff]
        %v472 = vld [vmem:[%s458 + $0x10] sm:$0xff]
        %v473 = vld [vmem:[%s458 + $0x18] sm:$0xff]
        %v474 = vld [vmem:[%s458 + $0x20] sm:$0xff]
        %v475 = vld [vmem:[%s458 + $0x28] sm:$0xff]
        %v476 = vld [vmem:[%s458 + $0x30] sm:$0xff]
        %v477 = vld [vmem:[%s458 + $0x38] sm:$0xff]
        %v478 = vpack.c.bf16 %v471, %v470
        %v479 = vpack.c.bf16 %v473, %v472
        %v480 = vpack.c.bf16 %v475, %v474
        %v481 = vpack.c.bf16 %v477, %v476
        %v482 = vld [vmem:[%s463] sm:$0xff]
        %v483 = vld [vmem:[%s463 + $0x8] sm:$0xff]
        %v484 = vld [vmem:[%s463 + $0x10] sm:$0xff]
        %v485 = vld [vmem:[%s463 + $0x18] sm:$0xff]
        %v486 = vld [vmem:[%s463 + $0x20] sm:$0xff]
        %v487 = vld [vmem:[%s463 + $0x28] sm:$0xff]
        %v488 = vld [vmem:[%s463 + $0x30] sm:$0xff]
        %v489 = vld [vmem:[%s463 + $0x38] sm:$0xff]
        %v490 = vpack.c.bf16 %v483, %v482
        %v491 = vpack.c.bf16 %v485, %v484
        %v492 = vpack.c.bf16 %v487, %v486
        %v493 = vpack.c.bf16 %v489, %v488
        %v494 = vld [vmem:[%s468] sm:$0xff]
        %v495 = vld [vmem:[%s468 + $0x8] sm:$0xff]
        %v496 = vld [vmem:[%s468 + $0x10] sm:$0xff]
        %v497 = vld [vmem:[%s468 + $0x18] sm:$0xff]
        %v498 = vld [vmem:[%s468 + $0x20] sm:$0xff]
        %v499 = vld [vmem:[%s468 + $0x28] sm:$0xff]
        %v500 = vld [vmem:[%s468 + $0x30] sm:$0xff]
        %v501 = vld [vmem:[%s468 + $0x38] sm:$0xff]
        %v502 = vpack.c.bf16 %v495, %v494
        %v503 = vpack.c.bf16 %v497, %v496
        %v504 = vpack.c.bf16 %v499, %v498
        %v505 = vpack.c.bf16 %v501, %v500
        %v506 = vld [vmem:[#allocation2] sm:$0xf]
        %v507 = vld [vmem:[#allocation2 + $0x4] sm:$0xf]
        %v508 = vld [vmem:[#allocation2 + $0x8] sm:$0xf]
        %v509 = vld [vmem:[#allocation2 + $0xc] sm:$0xf]
        %v510 = vld [vmem:[#allocation2 + $0x10] sm:$0xf]
        %v511 = vld [vmem:[#allocation2 + $0x14] sm:$0xf]
        %v512 = vld [vmem:[#allocation2 + $0x18] sm:$0xf]
        %v513 = vld [vmem:[#allocation2 + $0x1c] sm:$0xf]
        %v514 = vld [vmem:[%s4] sm:$0xff]
        %v515 = vld [vmem:[%s4 + $0x8] sm:$0xff]
        %v516 = vld [vmem:[%s4 + $0x10] sm:$0xff]
        %v517 = vld [vmem:[%s4 + $0x18] sm:$0xff]
        %v518 = vld [vmem:[%s4 + $0x20] sm:$0xff]
        %v519 = vld [vmem:[%s4 + $0x28] sm:$0xff]
        %v520 = vld [vmem:[%s4 + $0x30] sm:$0xff]
        %v521 = vld [vmem:[%s4 + $0x38] sm:$0xff]
        %523 = vset.pattern.permute.xlu0 0
        %524 = vperm.xlu0 %523, %v514
        %v525 = vpop.permute.xlu0 %524
        %528 = vset.pattern.permute.xlu0 0
        %529 = vperm.xlu0 %528, %v515
        %v530 = vpop.permute.xlu0 %529
        %533 = vset.pattern.permute.xlu0 0
        %534 = vperm.xlu0 %533, %v516
        %v535 = vpop.permute.xlu0 %534
        %538 = vset.pattern.permute.xlu0 0
        %539 = vperm.xlu0 %538, %v517
        %v540 = vpop.permute.xlu0 %539
        %543 = vset.pattern.permute.xlu0 0
        %544 = vperm.xlu0 %543, %v518
        %v545 = vpop.permute.xlu0 %544
        %548 = vset.pattern.permute.xlu0 0
        %549 = vperm.xlu0 %548, %v519
        %v550 = vpop.permute.xlu0 %549
        %553 = vset.pattern.permute.xlu0 0
        %554 = vperm.xlu0 %553, %v520
        %v555 = vpop.permute.xlu0 %554
        %558 = vset.pattern.permute.xlu0 0
        %559 = vperm.xlu0 %558, %v521
        %v560 = vpop.permute.xlu0 %559
        %v570 = vunpack.c.l.b16 %v506
        %v571 = vunpack.c.l.b16 %v507
        %v572 = vunpack.c.l.b16 %v508
        %v573 = vunpack.c.l.b16 %v509
        %v574 = vunpack.c.l.b16 %v510
        %v575 = vunpack.c.l.b16 %v511
        %v576 = vunpack.c.l.b16 %v512
        %v577 = vunpack.c.l.b16 %v513
        %v578 = vpack.c.b16 %v571, %v570
        %v579 = vpack.c.b16 %v573, %v572
        %v580 = vpack.c.b16 %v575, %v574
        %v581 = vpack.c.b16 %v577, %v576
        %vm582 = vcmask 523264
        %v584 = vsel %vm582, %v578, 0
        %v587 = vsel %vm582, %v579, 0
        %v590 = vsel %vm582, %v580, 0
        %v593 = vsel %vm582, %v581, 0
        %595 = vmatprep.subr.bf16.mxu0 0
        %596 = vmatpush1.bf16.msra.mxu0 %v478
        %597 = vmatprep.subr.bf16.mxu0 0
        %598 = vmatpush1.bf16.msra.mxu0 %v479
        %599 = vmatprep.subr.bf16.mxu0 0
        %600 = vmatpush1.bf16.msra.mxu0 %v480
        %601 = vmatprep.subr.bf16.mxu0 0
        %602 = vmatpush1.bf16.msra.mxu0 %v481
        %603 = vmatprep.subr.bf16.mxu0 0
        %604 = vmatpush1.bf16.msra.mxu0 0
        %605 = vmatprep.subr.bf16.mxu0 0
        %606 = vmatpush1.bf16.msra.mxu0 0
        %607 = vmatprep.subr.bf16.mxu0 0
        %608 = vmatpush1.bf16.msra.mxu0 0
        %609 = vmatprep.subr.bf16.mxu0 0
        %610 = vmatpush1.bf16.msra.mxu0 0
        %611 = vmatprep.subr.bf16.mxu0 0
        %612 = vmatpush1.bf16.msra.mxu0 0
        %613 = vmatprep.subr.bf16.mxu0 0
        %614 = vmatpush1.bf16.msra.mxu0 0
        %615 = vmatprep.subr.bf16.mxu0 0
        %616 = vmatpush1.bf16.msra.mxu0 0
        %617 = vmatprep.subr.bf16.mxu0 0
        %618 = vmatpush1.bf16.msra.mxu0 0
        %619 = vmatprep.subr.bf16.mxu0 0
        %620 = vmatpush1.bf16.msra.mxu0 0
        %621 = vmatprep.subr.bf16.mxu0 0
        %622 = vmatpush1.bf16.msra.mxu0 0
        %623 = vmatprep.subr.bf16.mxu0 0
        %624 = vmatpush1.bf16.msra.mxu0 0
        %625 = vmatprep.subr.bf16.mxu0 0
        %626 = vmatpush1.bf16.msra.mxu0 0
        %627 = vmatprep.mubr.bf16.mxu0 0
        %628 = vmatmul.mubr.bf16.gmra.mrb[0].mxu0 %v584
        %v629 = vpop.f32.mrb[0].mxu0
        %v630 = vadd.f32 %v525, %v629
        %v631 = vpop.f32.mrb[0].mxu0
        %v632 = vpop.f32.mrb[0].mxu0
        %v633 = vadd.f32 %v530, %v632
        %v634 = vpop.f32.mrb[0].mxu0
        %635 = vmatprep.mubr.bf16.mxu0 0
        %636 = vmatmul.mubr.bf16.gmra.mrb[0].mxu0 %v587
        %v637 = vpop.f32.mrb[0].mxu0
        %v638 = vadd.f32 %v535, %v637
        %v639 = vpop.f32.mrb[0].mxu0
        %v640 = vpop.f32.mrb[0].mxu0
        %v641 = vadd.f32 %v540, %v640
        %v642 = vpop.f32.mrb[0].mxu0
        %643 = vmatprep.mubr.bf16.mxu0 0
        %644 = vmatmul.mubr.bf16.gmra.mrb[0].mxu0 %v590
        %v645 = vpop.f32.mrb[0].mxu0
        %v646 = vadd.f32 %v545, %v645
        %v647 = vpop.f32.mrb[0].mxu0
        %v648 = vpop.f32.mrb[0].mxu0
        %v649 = vadd.f32 %v550, %v648
        %v650 = vpop.f32.mrb[0].mxu0
        %651 = vmatprep.mubr.bf16.mxu0 0
        %652 = vmatmul.mubr.bf16.gmra.mrb[0].mxu0 %v593
        %v653 = vpop.f32.mrb[0].mxu0
        %v654 = vadd.f32 %v555, %v653
        %v655 = vpop.f32.mrb[0].mxu0
        %v656 = vpop.f32.mrb[0].mxu0
        %v657 = vadd.f32 %v560, %v656
        %v658 = vpop.f32.mrb[0].mxu0
        %659 = vdwg.mxu0
        %v660 = vpack.c.bf16 %v633, %v630
        %v661 = vpack.c.bf16 %v641, %v638
        %v662 = vpack.c.bf16 %v649, %v646
        %v663 = vpack.c.bf16 %v657, %v654
        %v664 = vld [vmem:[#allocation5] sm:$0xf]
        %v665 = vld [vmem:[#allocation5 + $0x4] sm:$0xf]
        %v666 = vld [vmem:[#allocation5 + $0x8] sm:$0xf]
        %v667 = vld [vmem:[#allocation5 + $0xc] sm:$0xf]
        %v668 = vld [vmem:[#allocation5 + $0x10] sm:$0xf]
        %v669 = vld [vmem:[#allocation5 + $0x14] sm:$0xf]
        %v670 = vld [vmem:[#allocation5 + $0x18] sm:$0xf]
        %v671 = vld [vmem:[#allocation5 + $0x1c] sm:$0xf]
        %v672 = vld [vmem:[%s6] sm:$0xff]
        %v673 = vld [vmem:[%s6 + $0x8] sm:$0xff]
        %v674 = vld [vmem:[%s6 + $0x10] sm:$0xff]
        %v675 = vld [vmem:[%s6 + $0x18] sm:$0xff]
        %v676 = vld [vmem:[%s6 + $0x20] sm:$0xff]
        %v677 = vld [vmem:[%s6 + $0x28] sm:$0xff]
        %v678 = vld [vmem:[%s6 + $0x30] sm:$0xff]
        %v679 = vld [vmem:[%s6 + $0x38] sm:$0xff]
        %681 = vset.pattern.permute.xlu0 0
        %682 = vperm.xlu0 %681, %v672
        %v683 = vpop.permute.xlu0 %682
        %686 = vset.pattern.permute.xlu0 0
        %687 = vperm.xlu0 %686, %v673
        %v688 = vpop.permute.xlu0 %687
        %691 = vset.pattern.permute.xlu0 0
        %692 = vperm.xlu0 %691, %v674
        %v693 = vpop.permute.xlu0 %692
        %696 = vset.pattern.permute.xlu0 0
        %697 = vperm.xlu0 %696, %v675
        %v698 = vpop.permute.xlu0 %697
        %701 = vset.pattern.permute.xlu0 0
        %702 = vperm.xlu0 %701, %v676
        %v703 = vpop.permute.xlu0 %702
        %706 = vset.pattern.permute.xlu0 0
        %707 = vperm.xlu0 %706, %v677
        %v708 = vpop.permute.xlu0 %707
        %711 = vset.pattern.permute.xlu0 0
        %712 = vperm.xlu0 %711, %v678
        %v713 = vpop.permute.xlu0 %712
        %716 = vset.pattern.permute.xlu0 0
        %717 = vperm.xlu0 %716, %v679
        %v718 = vpop.permute.xlu0 %717
        %v728 = vunpack.c.l.b16 %v664
        %v729 = vunpack.c.l.b16 %v665
        %v730 = vunpack.c.l.b16 %v666
        %v731 = vunpack.c.l.b16 %v667
        %v732 = vunpack.c.l.b16 %v668
        %v733 = vunpack.c.l.b16 %v669
        %v734 = vunpack.c.l.b16 %v670
        %v735 = vunpack.c.l.b16 %v671
        %v736 = vpack.c.b16 %v729, %v728
        %v737 = vpack.c.b16 %v731, %v730
        %v738 = vpack.c.b16 %v733, %v732
        %v739 = vpack.c.b16 %v735, %v734
        %v741 = vsel %vm582, %v736, 0
        %v744 = vsel %vm582, %v737, 0
        %v747 = vsel %vm582, %v738, 0
        %v750 = vsel %vm582, %v739, 0
        %752 = vmatprep.subr.bf16.mxu0 0
        %753 = vmatpush1.bf16.msra.mxu0 %v490
        %754 = vmatprep.subr.bf16.mxu0 0
        %755 = vmatpush1.bf16.msra.mxu0 %v491
        %756 = vmatprep.subr.bf16.mxu0 0
        %757 = vmatpush1.bf16.msra.mxu0 %v492
        %758 = vmatprep.subr.bf16.mxu0 0
        %759 = vmatpush1.bf16.msra.mxu0 %v493
        %760 = vmatprep.subr.bf16.mxu0 0
        %761 = vmatpush1.bf16.msra.mxu0 0
        %762 = vmatprep.subr.bf16.mxu0 0
        %763 = vmatpush1.bf16.msra.mxu0 0
        %764 = vmatprep.subr.bf16.mxu0 0
        %765 = vmatpush1.bf16.msra.mxu0 0
        %766 = vmatprep.subr.bf16.mxu0 0
        %767 = vmatpush1.bf16.msra.mxu0 0
        %768 = vmatprep.subr.bf16.mxu0 0
        %769 = vmatpush1.bf16.msra.mxu0 0
        %770 = vmatprep.subr.bf16.mxu0 0
        %771 = vmatpush1.bf16.msra.mxu0 0
        %772 = vmatprep.subr.bf16.mxu0 0
        %773 = vmatpush1.bf16.msra.mxu0 0
        %774 = vmatprep.subr.bf16.mxu0 0
        %775 = vmatpush1.bf16.msra.mxu0 0
        %776 = vmatprep.subr.bf16.mxu0 0
        %777 = vmatpush1.bf16.msra.mxu0 0
        %778 = vmatprep.subr.bf16.mxu0 0
        %779 = vmatpush1.bf16.msra.mxu0 0
        %780 = vmatprep.subr.bf16.mxu0 0
        %781 = vmatpush1.bf16.msra.mxu0 0
        %782 = vmatprep.subr.bf16.mxu0 0
        %783 = vmatpush1.bf16.msra.mxu0 0
        %784 = vmatprep.mubr.bf16.mxu0 0
        %785 = vmatmul.mubr.bf16.gmra.mrb[0].mxu0 %v741
        %v786 = vpop.f32.mrb[0].mxu0
        %v787 = vadd.f32 %v683, %v786
        %v788 = vpop.f32.mrb[0].mxu0
        %v789 = vpop.f32.mrb[0].mxu0
        %v790 = vadd.f32 %v688, %v789
        %v791 = vpop.f32.mrb[0].mxu0
        %792 = vmatprep.mubr.bf16.mxu0 0
        %793 = vmatmul.mubr.bf16.gmra.mrb[0].mxu0 %v744
        %v794 = vpop.f32.mrb[0].mxu0
        %v795 = vadd.f32 %v693, %v794
        %v796 = vpop.f32.mrb[0].mxu0
        %v797 = vpop.f32.mrb[0].mxu0
        %v798 = vadd.f32 %v698, %v797
        %v799 = vpop.f32.mrb[0].mxu0
        %800 = vmatprep.mubr.bf16.mxu0 0
        %801 = vmatmul.mubr.bf16.gmra.mrb[0].mxu0 %v747
        %v802 = vpop.f32.mrb[0].mxu0
        %v803 = vadd.f32 %v703, %v802
        %v804 = vpop.f32.mrb[0].mxu0
        %v805 = vpop.f32.mrb[0].mxu0
        %v806 = vadd.f32 %v708, %v805
        %v807 = vpop.f32.mrb[0].mxu0
        %808 = vmatprep.mubr.bf16.mxu0 0
        %809 = vmatmul.mubr.bf16.gmra.mrb[0].mxu0 %v750
        %v810 = vpop.f32.mrb[0].mxu0
        %v811 = vadd.f32 %v713, %v810
        %v812 = vpop.f32.mrb[0].mxu0
        %v813 = vpop.f32.mrb[0].mxu0
        %v814 = vadd.f32 %v718, %v813
        %v815 = vpop.f32.mrb[0].mxu0
        %816 = vdwg.mxu0
        %v817 = vpack.c.bf16 %v790, %v787
        %v818 = vpack.c.bf16 %v798, %v795
        %v819 = vpack.c.bf16 %v806, %v803
        %v820 = vpack.c.bf16 %v814, %v811
        %v821 = vld [vmem:[#allocation7] sm:$0xf]
        %v822 = vld [vmem:[#allocation7 + $0x4] sm:$0xf]
        %v823 = vld [vmem:[#allocation7 + $0x8] sm:$0xf]
        %v824 = vld [vmem:[#allocation7 + $0xc] sm:$0xf]
        %v825 = vld [vmem:[#allocation7 + $0x10] sm:$0xf]
        %v826 = vld [vmem:[#allocation7 + $0x14] sm:$0xf]
        %v827 = vld [vmem:[#allocation7 + $0x18] sm:$0xf]
        %v828 = vld [vmem:[#allocation7 + $0x1c] sm:$0xf]
        %v829 = vld [vmem:[%s8] sm:$0xff]
        %v830 = vld [vmem:[%s8 + $0x8] sm:$0xff]
        %v831 = vld [vmem:[%s8 + $0x10] sm:$0xff]
        %v832 = vld [vmem:[%s8 + $0x18] sm:$0xff]
        %v833 = vld [vmem:[%s8 + $0x20] sm:$0xff]
        %v834 = vld [vmem:[%s8 + $0x28] sm:$0xff]
        %v835 = vld [vmem:[%s8 + $0x30] sm:$0xff]
        %v836 = vld [vmem:[%s8 + $0x38] sm:$0xff]
        %838 = vset.pattern.permute.xlu0 0
        %839 = vperm.xlu0 %838, %v829
        %v840 = vpop.permute.xlu0 %839
        %843 = vset.pattern.permute.xlu0 0
        %844 = vperm.xlu0 %843, %v830
        %v845 = vpop.permute.xlu0 %844
        %848 = vset.pattern.permute.xlu0 0
        %849 = vperm.xlu0 %848, %v831
        %v850 = vpop.permute.xlu0 %849
        %853 = vset.pattern.permute.xlu0 0
        %854 = vperm.xlu0 %853, %v832
        %v855 = vpop.permute.xlu0 %854
        %858 = vset.pattern.permute.xlu0 0
        %859 = vperm.xlu0 %858, %v833
        %v860 = vpop.permute.xlu0 %859
        %863 = vset.pattern.permute.xlu0 0
        %864 = vperm.xlu0 %863, %v834
        %v865 = vpop.permute.xlu0 %864
        %868 = vset.pattern.permute.xlu0 0
        %869 = vperm.xlu0 %868, %v835
        %v870 = vpop.permute.xlu0 %869
        %873 = vset.pattern.permute.xlu0 0
        %874 = vperm.xlu0 %873, %v836
        %v875 = vpop.permute.xlu0 %874
        %v885 = vunpack.c.l.b16 %v821
        %v886 = vunpack.c.l.b16 %v822
        %v887 = vunpack.c.l.b16 %v823
        %v888 = vunpack.c.l.b16 %v824
        %v889 = vunpack.c.l.b16 %v825
        %v890 = vunpack.c.l.b16 %v826
        %v891 = vunpack.c.l.b16 %v827
        %v892 = vunpack.c.l.b16 %v828
        %v893 = vpack.c.b16 %v886, %v885
        %v894 = vpack.c.b16 %v888, %v887
        %v895 = vpack.c.b16 %v890, %v889
        %v896 = vpack.c.b16 %v892, %v891
        %v898 = vsel %vm582, %v893, 0
        %v901 = vsel %vm582, %v894, 0
        %v904 = vsel %vm582, %v895, 0
        %v907 = vsel %vm582, %v896, 0
        %909 = vmatprep.subr.bf16.mxu0 0
        %910 = vmatpush1.bf16.msra.mxu0 %v502
        %911 = vmatprep.subr.bf16.mxu0 0
        %912 = vmatpush1.bf16.msra.mxu0 %v503
        %913 = vmatprep.subr.bf16.mxu0 0
        %914 = vmatpush1.bf16.msra.mxu0 %v504
        %915 = vmatprep.subr.bf16.mxu0 0
        %916 = vmatpush1.bf16.msra.mxu0 %v505
        %917 = vmatprep.subr.bf16.mxu0 0
        %918 = vmatpush1.bf16.msra.mxu0 0
        %919 = vmatprep.subr.bf16.mxu0 0
        %920 = vmatpush1.bf16.msra.mxu0 0
        %921 = vmatprep.subr.bf16.mxu0 0
        %922 = vmatpush1.bf16.msra.mxu0 0
        %923 = vmatprep.subr.bf16.mxu0 0
        %924 = vmatpush1.bf16.msra.mxu0 0
        %925 = vmatprep.subr.bf16.mxu0 0
        %926 = vmatpush1.bf16.msra.mxu0 0
        %927 = vmatprep.subr.bf16.mxu0 0
        %928 = vmatpush1.bf16.msra.mxu0 0
        %929 = vmatprep.subr.bf16.mxu0 0
        %930 = vmatpush1.bf16.msra.mxu0 0
        %931 = vmatprep.subr.bf16.mxu0 0
        %932 = vmatpush1.bf16.msra.mxu0 0
        %933 = vmatprep.subr.bf16.mxu0 0
        %934 = vmatpush1.bf16.msra.mxu0 0
        %935 = vmatprep.subr.bf16.mxu0 0
        %936 = vmatpush1.bf16.msra.mxu0 0
        %937 = vmatprep.subr.bf16.mxu0 0
        %938 = vmatpush1.bf16.msra.mxu0 0
        %939 = vmatprep.subr.bf16.mxu0 0
        %940 = vmatpush1.bf16.msra.mxu0 0
        %941 = vmatprep.mubr.bf16.mxu0 0
        %942 = vmatmul.mubr.bf16.gmra.mrb[0].mxu0 %v898
        %v943 = vpop.f32.mrb[0].mxu0
        %v944 = vadd.f32 %v840, %v943
        %v945 = vpop.f32.mrb[0].mxu0
        %v946 = vpop.f32.mrb[0].mxu0
        %v947 = vadd.f32 %v845, %v946
        %v948 = vpop.f32.mrb[0].mxu0
        %949 = vmatprep.mubr.bf16.mxu0 0
        %950 = vmatmul.mubr.bf16.gmra.mrb[0].mxu0 %v901
        %v951 = vpop.f32.mrb[0].mxu0
        %v952 = vadd.f32 %v850, %v951
        %v953 = vpop.f32.mrb[0].mxu0
        %v954 = vpop.f32.mrb[0].mxu0
        %v955 = vadd.f32 %v855, %v954
        %v956 = vpop.f32.mrb[0].mxu0
        %957 = vmatprep.mubr.bf16.mxu0 0
        %958 = vmatmul.mubr.bf16.gmra.mrb[0].mxu0 %v904
        %v959 = vpop.f32.mrb[0].mxu0
        %v960 = vadd.f32 %v860, %v959
        %v961 = vpop.f32.mrb[0].mxu0
        %v962 = vpop.f32.mrb[0].mxu0
        %v963 = vadd.f32 %v865, %v962
        %v964 = vpop.f32.mrb[0].mxu0
        %965 = vmatprep.mubr.bf16.mxu0 0
        %966 = vmatmul.mubr.bf16.gmra.mrb[0].mxu0 %v907
        %v967 = vpop.f32.mrb[0].mxu0
        %v968 = vadd.f32 %v870, %v967
        %v969 = vpop.f32.mrb[0].mxu0
        %v970 = vpop.f32.mrb[0].mxu0
        %v971 = vadd.f32 %v875, %v970
        %v972 = vpop.f32.mrb[0].mxu0
        %973 = vdwg.mxu0
        %v974 = vpack.c.bf16 %v947, %v944
        %v975 = vpack.c.bf16 %v955, %v952
        %v976 = vpack.c.bf16 %v963, %v960
        %v977 = vpack.c.bf16 %v971, %v968
        %v978 = vlaneseq
        %v979 = vshrl.u32 %v978, 7
        %v980 = vadd.s32 %v979, 8
        %v981 = vadd.s32 %v979, 16
        %v982 = vadd.s32 %v979, 24
        %v983 = vadd.s32 %v979, 32
        %v984 = vadd.s32 %v979, 40
        %v985 = vadd.s32 %v979, 48
        %v986 = vadd.s32 %v979, 56
        %v987 = vadd.s32 %v979, 64
        %v988 = vadd.s32 %v979, 72
        %v989 = vadd.s32 %v979, 80
        %v990 = vadd.s32 %v979, 88
        %v991 = vadd.s32 %v979, 96
        %v992 = vadd.s32 %v979, 104
        %v993 = vadd.s32 %v979, 112
        %v994 = vadd.s32 %v979, 120
        %vm995 = vcmp.lt.s32.totalorder %v979, 64
        %vm996 = vcmp.lt.s32.totalorder %v980, 64
        %vm997 = vcmp.lt.s32.totalorder %v981, 64
        %vm998 = vcmp.lt.s32.totalorder %v982, 64
        %vm999 = vcmp.lt.s32.totalorder %v983, 64
        %vm1000 = vcmp.lt.s32.totalorder %v984, 64
        %vm1001 = vcmp.lt.s32.totalorder %v985, 64
        %vm1002 = vcmp.lt.s32.totalorder %v986, 64
        %vm1003 = vcmp.lt.s32.totalorder %v987, 64
        %vm1004 = vcmp.lt.s32.totalorder %v988, 64
        %vm1005 = vcmp.lt.s32.totalorder %v989, 64
        %vm1006 = vcmp.lt.s32.totalorder %v990, 64
        %vm1007 = vcmp.lt.s32.totalorder %v991, 64
        %vm1008 = vcmp.lt.s32.totalorder %v992, 64
        %vm1009 = vcmp.lt.s32.totalorder %v993, 64
        %vm1010 = vcmp.lt.s32.totalorder %v994, 64
        %1011 = vxpose.xlu0.c.b16.start [1/8] %v817, 128
        %1012 = vxpose.xlu0.c.b16.cont [2/8] 0, 128
        %1013 = vxpose.xlu0.c.b16.cont [3/8] 0, 128
        %1014 = vxpose.xlu0.c.b16.cont [4/8] 0, 128
        %1015 = vxpose.xlu0.c.b16.cont [5/8] 0, 128
        %1016 = vxpose.xlu0.c.b16.cont [6/8] 0, 128
        %1017 = vxpose.xlu0.c.b16.cont [7/8] 0, 128
        %1018 = vxpose.xlu0.c.b16.end [8/8] 0, 128
        %v1019 = vpop.trf.xlu0
        %v1020 = vpop.trf.xlu0
        %v1021 = vpop.trf.xlu0
        %v1022 = vpop.trf.xlu0
        %v1023 = vpop.trf.xlu0
        %v1024 = vpop.trf.xlu0
        %v1025 = vpop.trf.xlu0
        %v1026 = vpop.trf.xlu0
        %vm1027 = vcmask 130048
        %v1029 = vsel %vm1027, %v1019, 0
        %v1032 = vsel %vm1027, %v1020, 0
        %v1035 = vsel %vm1027, %v1021, 0
        %v1038 = vsel %vm1027, %v1022, 0
        %v1041 = vsel %vm1027, %v1023, 0
        %v1044 = vsel %vm1027, %v1024, 0
        %v1047 = vsel %vm1027, %v1025, 0
        %v1050 = vsel %vm1027, %v1026, 0
        %1052 = vmatprep.subr.bf16.mxu0 0
        %1053 = vmatpush1.bf16.msra.mxu0 %v660
        %1054 = vmatprep.subr.bf16.mxu0 0
        %1055 = vmatpush1.bf16.msra.mxu0 0
        %1056 = vmatprep.subr.bf16.mxu0 0
        %1057 = vmatpush1.bf16.msra.mxu0 0
        %1058 = vmatprep.subr.bf16.mxu0 0
        %1059 = vmatpush1.bf16.msra.mxu0 0
        %1060 = vmatprep.subr.bf16.mxu0 0
        %1061 = vmatpush1.bf16.msra.mxu0 0
        %1062 = vmatprep.subr.bf16.mxu0 0
        %1063 = vmatpush1.bf16.msra.mxu0 0
        %1064 = vmatprep.subr.bf16.mxu0 0
        %1065 = vmatpush1.bf16.msra.mxu0 0
        %1066 = vmatprep.subr.bf16.mxu0 0
        %1067 = vmatpush1.bf16.msra.mxu0 0
        %1068 = vmatprep.subr.bf16.mxu0 0
        %1069 = vmatpush1.bf16.msra.mxu0 0
        %1070 = vmatprep.subr.bf16.mxu0 0
        %1071 = vmatpush1.bf16.msra.mxu0 0
        %1072 = vmatprep.subr.bf16.mxu0 0
        %1073 = vmatpush1.bf16.msra.mxu0 0
        %1074 = vmatprep.subr.bf16.mxu0 0
        %1075 = vmatpush1.bf16.msra.mxu0 0
        %1076 = vmatprep.subr.bf16.mxu0 0
        %1077 = vmatpush1.bf16.msra.mxu0 0
        %1078 = vmatprep.subr.bf16.mxu0 0
        %1079 = vmatpush1.bf16.msra.mxu0 0
        %1080 = vmatprep.subr.bf16.mxu0 0
        %1081 = vmatpush1.bf16.msra.mxu0 0
        %1082 = vmatprep.subr.bf16.mxu0 0
        %1083 = vmatpush1.bf16.msra.mxu0 0
        %1084 = vmatprep.mubr.bf16.mxu0 0
        %1085 = vmatmul.mubr.bf16.gmra.mrb[0].mxu0 %v1029
        %v1086 = vpop.f32.mrb[0].mxu0
        %v1087 = vadd.f32 0.0, %v1086
        %v1088 = vpop.f32.mrb[0].mxu0
        %v1089 = vpop.f32.mrb[0].mxu0
        %v1090 = vadd.f32 0.0, %v1089
        %v1091 = vpop.f32.mrb[0].mxu0
        %1092 = vmatprep.mubr.bf16.mxu0 0
        %1093 = vmatmul.mubr.bf16.gmra.mrb[0].mxu0 %v1032
        %v1094 = vpop.f32.mrb[0].mxu0
        %v1095 = vadd.f32 0.0, %v1094
        %v1096 = vpop.f32.mrb[0].mxu0
        %v1097 = vpop.f32.mrb[0].mxu0
        %v1098 = vadd.f32 0.0, %v1097
        %v1099 = vpop.f32.mrb[0].mxu0
        %1100 = vmatprep.mubr.bf16.mxu0 0
        %1101 = vmatmul.mubr.bf16.gmra.mrb[0].mxu0 %v1035
        %v1102 = vpop.f32.mrb[0].mxu0
        %v1103 = vadd.f32 0.0, %v1102
        %v1104 = vpop.f32.mrb[0].mxu0
        %v1105 = vpop.f32.mrb[0].mxu0
        %v1106 = vadd.f32 0.0, %v1105
        %v1107 = vpop.f32.mrb[0].mxu0
        %1108 = vmatprep.mubr.bf16.mxu0 0
        %1109 = vmatmul.mubr.bf16.gmra.mrb[0].mxu0 %v1038
        %v1110 = vpop.f32.mrb[0].mxu0
        %v1111 = vadd.f32 0.0, %v1110
        %v1112 = vpop.f32.mrb[0].mxu0
        %v1113 = vpop.f32.mrb[0].mxu0
        %v1114 = vadd.f32 0.0, %v1113
        %v1115 = vpop.f32.mrb[0].mxu0
        %1116 = vmatprep.mubr.bf16.mxu0 0
        %1117 = vmatmul.mubr.bf16.gmra.mrb[0].mxu0 %v1041
        %v1118 = vpop.f32.mrb[0].mxu0
        %v1119 = vadd.f32 0.0, %v1118
        %v1120 = vpop.f32.mrb[0].mxu0
        %v1121 = vpop.f32.mrb[0].mxu0
        %v1122 = vadd.f32 0.0, %v1121
        %v1123 = vpop.f32.mrb[0].mxu0
        %1124 = vmatprep.mubr.bf16.mxu0 0
        %1125 = vmatmul.mubr.bf16.gmra.mrb[0].mxu0 %v1044
        %v1126 = vpop.f32.mrb[0].mxu0
        %v1127 = vadd.f32 0.0, %v1126
        %v1128 = vpop.f32.mrb[0].mxu0
        %v1129 = vpop.f32.mrb[0].mxu0
        %v1130 = vadd.f32 0.0, %v1129
        %v1131 = vpop.f32.mrb[0].mxu0
        %1132 = vmatprep.mubr.bf16.mxu0 0
        %1133 = vmatmul.mubr.bf16.gmra.mrb[0].mxu0 %v1047
        %v1134 = vpop.f32.mrb[0].mxu0
        %v1135 = vadd.f32 0.0, %v1134
        %v1136 = vpop.f32.mrb[0].mxu0
        %v1137 = vpop.f32.mrb[0].mxu0
        %v1138 = vadd.f32 0.0, %v1137
        %v1139 = vpop.f32.mrb[0].mxu0
        %1140 = vmatprep.mubr.bf16.mxu0 0
        %1141 = vmatmul.mubr.bf16.gmra.mrb[0].mxu0 %v1050
        %v1142 = vpop.f32.mrb[0].mxu0
        %v1143 = vadd.f32 0.0, %v1142
        %v1144 = vpop.f32.mrb[0].mxu0
        %v1145 = vpop.f32.mrb[0].mxu0
        %v1146 = vadd.f32 0.0, %v1145
        %v1147 = vpop.f32.mrb[0].mxu0
        %1148 = vdwg.mxu0
        %v1149 = vsel %vm995, 1, 0
        %v1150 = vsel %vm996, 1, 0
        %v1151 = vsel %vm997, 1, 0
        %v1152 = vsel %vm998, 1, 0
        %v1153 = vsel %vm999, 1, 0
        %v1154 = vsel %vm1000, 1, 0
        %v1155 = vsel %vm1001, 1, 0
        %v1156 = vsel %vm1002, 1, 0
        %v1157 = vsel %vm1003, 1, 0
        %v1158 = vsel %vm1004, 1, 0
        %v1159 = vsel %vm1005, 1, 0
        %v1160 = vsel %vm1006, 1, 0
        %v1161 = vsel %vm1007, 1, 0
        %v1162 = vsel %vm1008, 1, 0
        %v1163 = vsel %vm1009, 1, 0
        %v1164 = vsel %vm1010, 1, 0
        %vm1165 = vcmp.eq.s32.totalorder %v1149, 1
        %vm1166 = vcmp.eq.s32.totalorder %v1150, 1
        %vm1167 = vcmp.eq.s32.totalorder %v1151, 1
        %vm1168 = vcmp.eq.s32.totalorder %v1152, 1
        %vm1169 = vcmp.eq.s32.totalorder %v1153, 1
        %vm1170 = vcmp.eq.s32.totalorder %v1154, 1
        %vm1171 = vcmp.eq.s32.totalorder %v1155, 1
        %vm1172 = vcmp.eq.s32.totalorder %v1156, 1
        %vm1173 = vcmp.eq.s32.totalorder %v1157, 1
        %vm1174 = vcmp.eq.s32.totalorder %v1158, 1
        %vm1175 = vcmp.eq.s32.totalorder %v1159, 1
        %vm1176 = vcmp.eq.s32.totalorder %v1160, 1
        %vm1177 = vcmp.eq.s32.totalorder %v1161, 1
        %vm1178 = vcmp.eq.s32.totalorder %v1162, 1
        %vm1179 = vcmp.eq.s32.totalorder %v1163, 1
        %vm1180 = vcmp.eq.s32.totalorder %v1164, 1
        %v1181 = vsel %vm1165, %v1087, -1e+30
        %v1182 = vsel %vm1166, %v1090, -1e+30
        %v1183 = vsel %vm1167, %v1095, -1e+30
        %v1184 = vsel %vm1168, %v1098, -1e+30
        %v1185 = vsel %vm1169, %v1103, -1e+30
        %v1186 = vsel %vm1170, %v1106, -1e+30
        %v1187 = vsel %vm1171, %v1111, -1e+30
        %v1188 = vsel %vm1172, %v1114, -1e+30
        %v1189 = vsel %vm1173, %v1119, -1e+30
        %v1190 = vsel %vm1174, %v1122, -1e+30
        %v1191 = vsel %vm1175, %v1127, -1e+30
        %v1192 = vsel %vm1176, %v1130, -1e+30
        %v1193 = vsel %vm1177, %v1135, -1e+30
        %v1194 = vsel %vm1178, %v1138, -1e+30
        %v1195 = vsel %vm1179, %v1143, -1e+30
        %v1196 = vsel %vm1180, %v1146, -1e+30
        %v1197 = vmax.f32 %v1181, %v1185
        %v1198 = vmax.f32 %v1182, %v1186
        %v1199 = vmax.f32 %v1183, %v1187
        %v1200 = vmax.f32 %v1184, %v1188
        %v1201 = vmax.f32 %v1197, %v1189
        %v1202 = vmax.f32 %v1198, %v1190
        %v1203 = vmax.f32 %v1199, %v1191
        %v1204 = vmax.f32 %v1200, %v1192
        %v1205 = vmax.f32 %v1201, %v1193
        %v1206 = vmax.f32 %v1202, %v1194
        %v1207 = vmax.f32 %v1203, %v1195
        %v1208 = vmax.f32 %v1204, %v1196
        %v1209 = vmax.f32 %v1205, %v1206
        %v1210 = vmax.f32 %v1207, %v1208
        %v1211 = vmax.f32 %v1209, %v1210
        %v1212 = vrot.slane %v1211, 4
        %v1213 = vmax.f32 %v1211, %v1212
        %v1214 = vrot.slane %v1213, 2
        %v1215 = vmax.f32 %v1213, %v1214
        %v1216 = vrot.slane %v1215, 1
        %v1217 = vmax.f32 %v1215, %v1216
        %v1218 = vsub.f32 %v1181, %v1217
        %v1219 = vsub.f32 %v1182, %v1217
        %v1220 = vsub.f32 %v1183, %v1217
        %v1221 = vsub.f32 %v1184, %v1217
        %v1222 = vsub.f32 %v1185, %v1217
        %v1223 = vsub.f32 %v1186, %v1217
        %v1224 = vsub.f32 %v1187, %v1217
        %v1225 = vsub.f32 %v1188, %v1217
        %v1226 = vsub.f32 %v1189, %v1217
        %v1227 = vsub.f32 %v1190, %v1217
        %v1228 = vsub.f32 %v1191, %v1217
        %v1229 = vsub.f32 %v1192, %v1217
        %v1230 = vsub.f32 %v1193, %v1217
        %v1231 = vsub.f32 %v1194, %v1217
        %v1232 = vsub.f32 %v1195, %v1217
        %v1233 = vsub.f32 %v1196, %v1217
        %v1234 = vmul.f32 %v1218, 1.442695
        %v1235 = vpow.pop %v1234
        %v1236 = vmul.f32 %v1219, 1.442695
        %v1237 = vpow.pop %v1236
        %v1238 = vmul.f32 %v1220, 1.442695
        %v1239 = vpow.pop %v1238
        %v1240 = vmul.f32 %v1221, 1.442695
        %v1241 = vpow.pop %v1240
        %v1242 = vmul.f32 %v1222, 1.442695
        %v1243 = vpow.pop %v1242
        %v1244 = vmul.f32 %v1223, 1.442695
        %v1245 = vpow.pop %v1244
        %v1246 = vmul.f32 %v1224, 1.442695
        %v1247 = vpow.pop %v1246
        %v1248 = vmul.f32 %v1225, 1.442695
        %v1249 = vpow.pop %v1248
        %v1250 = vmul.f32 %v1226, 1.442695
        %v1251 = vpow.pop %v1250
        %v1252 = vmul.f32 %v1227, 1.442695
        %v1253 = vpow.pop %v1252
        %v1254 = vmul.f32 %v1228, 1.442695
        %v1255 = vpow.pop %v1254
        %v1256 = vmul.f32 %v1229, 1.442695
        %v1257 = vpow.pop %v1256
        %v1258 = vmul.f32 %v1230, 1.442695
        %v1259 = vpow.pop %v1258
        %v1260 = vmul.f32 %v1231, 1.442695
        %v1261 = vpow.pop %v1260
        %v1262 = vmul.f32 %v1232, 1.442695
        %v1263 = vpow.pop %v1262
        %v1264 = vmul.f32 %v1233, 1.442695
        %v1265 = vpow.pop %v1264
        %v1266 = vadd.f32 %v1235, %v1237
        %v1267 = vadd.f32 %v1266, %v1239
        %v1268 = vadd.f32 %v1267, %v1241
        %v1269 = vadd.f32 %v1268, %v1243
        %v1270 = vadd.f32 %v1269, %v1245
        %v1271 = vadd.f32 %v1270, %v1247
        %v1272 = vadd.f32 %v1271, %v1249
        %v1273 = vadd.f32 %v1272, %v1251
        %v1274 = vadd.f32 %v1273, %v1253
        %v1275 = vadd.f32 %v1274, %v1255
        %v1276 = vadd.f32 %v1275, %v1257
        %v1277 = vadd.f32 %v1276, %v1259
        %v1278 = vadd.f32 %v1277, %v1261
        %v1279 = vadd.f32 %v1278, %v1263
        %v1280 = vadd.f32 %v1279, %v1265
        %v1281 = vrot.slane %v1280, 4
        %v1282 = vadd.f32 %v1280, %v1281
        %v1283 = vrot.slane %v1282, 2
        %v1284 = vadd.f32 %v1282, %v1283
        %v1285 = vrot.slane %v1284, 1
        %v1286 = vadd.f32 %v1284, %v1285
        %v1287 = vpack.c.bf16 %v1237, %v1235
        %v1288 = vpack.c.bf16 %v1241, %v1239
        %v1289 = vpack.c.bf16 %v1245, %v1243
        %v1290 = vpack.c.bf16 %v1249, %v1247
        %v1291 = vpack.c.bf16 %v1253, %v1251
        %v1292 = vpack.c.bf16 %v1257, %v1255
        %v1293 = vpack.c.bf16 %v1261, %v1259
        %v1294 = vpack.c.bf16 %v1265, %v1263
        %1295 = vmatprep.subr.bf16.mxu0 0
        %1296 = vmatpush1.bf16.msra.mxu0 %v1287
        %1297 = vmatprep.subr.bf16.mxu0 0
        %1298 = vmatpush1.bf16.msra.mxu0 %v1288
        %1299 = vmatprep.subr.bf16.mxu0 0
        %1300 = vmatpush1.bf16.msra.mxu0 %v1289
        %1301 = vmatprep.subr.bf16.mxu0 0
        %1302 = vmatpush1.bf16.msra.mxu0 %v1290
        %1303 = vmatprep.subr.bf16.mxu0 0
        %1304 = vmatpush1.bf16.msra.mxu0 %v1291
        %1305 = vmatprep.subr.bf16.mxu0 0
        %1306 = vmatpush1.bf16.msra.mxu0 %v1292
        %1307 = vmatprep.subr.bf16.mxu0 0
        %1308 = vmatpush1.bf16.msra.mxu0 %v1293
        %1309 = vmatprep.subr.bf16.mxu0 0
        %1310 = vmatpush1.bf16.msra.mxu0 %v1294
        %1311 = vmatprep.subr.bf16.mxu0 0
        %1312 = vmatpush1.bf16.msra.mxu0 0
        %1313 = vmatprep.subr.bf16.mxu0 0
        %1314 = vmatpush1.bf16.msra.mxu0 0
        %1315 = vmatprep.subr.bf16.mxu0 0
        %1316 = vmatpush1.bf16.msra.mxu0 0
        %1317 = vmatprep.subr.bf16.mxu0 0
        %1318 = vmatpush1.bf16.msra.mxu0 0
        %1319 = vmatprep.subr.bf16.mxu0 0
        %1320 = vmatpush1.bf16.msra.mxu0 0
        %1321 = vmatprep.subr.bf16.mxu0 0
        %1322 = vmatpush1.bf16.msra.mxu0 0
        %1323 = vmatprep.subr.bf16.mxu0 0
        %1324 = vmatpush1.bf16.msra.mxu0 0
        %1325 = vmatprep.subr.bf16.mxu0 0
        %1326 = vmatpush1.bf16.msra.mxu0 0
        %1327 = vmatprep.mubr.bf16.mxu0 0
        %1328 = vmatmul.mubr.bf16.gmra.mrb[0].mxu0 %v974
        %v1329 = vpop.f32.mrb[0].mxu0
        %v1330 = vadd.f32 0.0, %v1329
        %v1331 = vpop.f32.mrb[0].mxu0
        %v1332 = vpop.f32.mrb[0].mxu0
        %v1333 = vadd.f32 0.0, %v1332
        %v1334 = vpop.f32.mrb[0].mxu0
        %1335 = vdwg.mxu0
        %v1336 = vrcp.pop %v1286
        %v1337 = vmul.f32 %v1330, %v1336
        %v1338 = vmul.f32 %v1333, %v1336
        %v1339 = vld [vmem:[%s9] sm:$0xf]
        %v1340 = vld [vmem:[%s9 + $0x4] sm:$0xf]
        %v1341 = vld [vmem:[%s9 + $0x8] sm:$0xf]
        %v1342 = vld [vmem:[%s9 + $0xc] sm:$0xf]
        %v1343 = vld [vmem:[%s9 + $0x10] sm:$0xf]
        %v1344 = vld [vmem:[%s9 + $0x14] sm:$0xf]
        %v1345 = vld [vmem:[%s9 + $0x18] sm:$0xf]
        %v1346 = vld [vmem:[%s9 + $0x1c] sm:$0xf]
        %v1347 = vpack.c.bf16 %v1338, %v1337
        %1348 = vxpose.xlu0.c.b16.start [1/8] %v818, 128
        %1349 = vxpose.xlu0.c.b16.cont [2/8] 0, 128
        %1350 = vxpose.xlu0.c.b16.cont [3/8] 0, 128
        %1351 = vxpose.xlu0.c.b16.cont [4/8] 0, 128
        %1352 = vxpose.xlu0.c.b16.cont [5/8] 0, 128
        %1353 = vxpose.xlu0.c.b16.cont [6/8] 0, 128
        %1354 = vxpose.xlu0.c.b16.cont [7/8] 0, 128
        %1355 = vxpose.xlu0.c.b16.end [8/8] 0, 128
        %v1356 = vpop.trf.xlu0
        %v1357 = vpop.trf.xlu0
        %v1358 = vpop.trf.xlu0
        %v1359 = vpop.trf.xlu0
        %v1360 = vpop.trf.xlu0
        %v1361 = vpop.trf.xlu0
        %v1362 = vpop.trf.xlu0
        %v1363 = vpop.trf.xlu0
        %v1365 = vsel %vm1027, %v1356, 0
        %v1368 = vsel %vm1027, %v1357, 0
        %v1371 = vsel %vm1027, %v1358, 0
        %v1374 = vsel %vm1027, %v1359, 0
        %v1377 = vsel %vm1027, %v1360, 0
        %v1380 = vsel %vm1027, %v1361, 0
        %v1383 = vsel %vm1027, %v1362, 0
        %v1386 = vsel %vm1027, %v1363, 0
        %1388 = vmatprep.subr.bf16.mxu0 0
        %1389 = vmatpush1.bf16.msra.mxu0 %v661
        %1390 = vmatprep.subr.bf16.mxu0 0
        %1391 = vmatpush1.bf16.msra.mxu0 0
        %1392 = vmatprep.subr.bf16.mxu0 0
        %1393 = vmatpush1.bf16.msra.mxu0 0
        %1394 = vmatprep.subr.bf16.mxu0 0
        %1395 = vmatpush1.bf16.msra.mxu0 0
        %1396 = vmatprep.subr.bf16.mxu0 0
        %1397 = vmatpush1.bf16.msra.mxu0 0
        %1398 = vmatprep.subr.bf16.mxu0 0
        %1399 = vmatpush1.bf16.msra.mxu0 0
        %1400 = vmatprep.subr.bf16.mxu0 0
        %1401 = vmatpush1.bf16.msra.mxu0 0
        %1402 = vmatprep.subr.bf16.mxu0 0
        %1403 = vmatpush1.bf16.msra.mxu0 0
        %1404 = vmatprep.subr.bf16.mxu0 0
        %1405 = vmatpush1.bf16.msra.mxu0 0
        %1406 = vmatprep.subr.bf16.mxu0 0
        %1407 = vmatpush1.bf16.msra.mxu0 0
        %1408 = vmatprep.subr.bf16.mxu0 0
        %1409 = vmatpush1.bf16.msra.mxu0 0
        %1410 = vmatprep.subr.bf16.mxu0 0
        %1411 = vmatpush1.bf16.msra.mxu0 0
        %1412 = vmatprep.subr.bf16.mxu0 0
        %1413 = vmatpush1.bf16.msra.mxu0 0
        %1414 = vmatprep.subr.bf16.mxu0 0
        %1415 = vmatpush1.bf16.msra.mxu0 0
        %1416 = vmatprep.subr.bf16.mxu0 0
        %1417 = vmatpush1.bf16.msra.mxu0 0
        %1418 = vmatprep.subr.bf16.mxu0 0
        %1419 = vmatpush1.bf16.msra.mxu0 0
        %1420 = vmatprep.mubr.bf16.mxu0 0
        %1421 = vmatmul.mubr.bf16.gmra.mrb[0].mxu0 %v1365
        %v1422 = vpop.f32.mrb[0].mxu0
        %v1423 = vadd.f32 0.0, %v1422
        %v1424 = vpop.f32.mrb[0].mxu0
        %v1425 = vpop.f32.mrb[0].mxu0
        %v1426 = vadd.f32 0.0, %v1425
        %v1427 = vpop.f32.mrb[0].mxu0
        %1428 = vmatprep.mubr.bf16.mxu0 0
        %1429 = vmatmul.mubr.bf16.gmra.mrb[0].mxu0 %v1368
        %v1430 = vpop.f32.mrb[0].mxu0
        %v1431 = vadd.f32 0.0, %v1430
        %v1432 = vpop.f32.mrb[0].mxu0
        %v1433 = vpop.f32.mrb[0].mxu0
        %v1434 = vadd.f32 0.0, %v1433
        %v1435 = vpop.f32.mrb[0].mxu0
        %1436 = vmatprep.mubr.bf16.mxu0 0
        %1437 = vmatmul.mubr.bf16.gmra.mrb[0].mxu0 %v1371
        %v1438 = vpop.f32.mrb[0].mxu0
        %v1439 = vadd.f32 0.0, %v1438
        %v1440 = vpop.f32.mrb[0].mxu0
        %v1441 = vpop.f32.mrb[0].mxu0
        %v1442 = vadd.f32 0.0, %v1441
        %v1443 = vpop.f32.mrb[0].mxu0
        %1444 = vmatprep.mubr.bf16.mxu0 0
        %1445 = vmatmul.mubr.bf16.gmra.mrb[0].mxu0 %v1374
        %v1446 = vpop.f32.mrb[0].mxu0
        %v1447 = vadd.f32 0.0, %v1446
        %v1448 = vpop.f32.mrb[0].mxu0
        %v1449 = vpop.f32.mrb[0].mxu0
        %v1450 = vadd.f32 0.0, %v1449
        %v1451 = vpop.f32.mrb[0].mxu0
        %1452 = vmatprep.mubr.bf16.mxu0 0
        %1453 = vmatmul.mubr.bf16.gmra.mrb[0].mxu0 %v1377
        %v1454 = vpop.f32.mrb[0].mxu0
        %v1455 = vadd.f32 0.0, %v1454
        %v1456 = vpop.f32.mrb[0].mxu0
        %v1457 = vpop.f32.mrb[0].mxu0
        %v1458 = vadd.f32 0.0, %v1457
        %v1459 = vpop.f32.mrb[0].mxu0
        %1460 = vmatprep.mubr.bf16.mxu0 0
        %1461 = vmatmul.mubr.bf16.gmra.mrb[0].mxu0 %v1380
        %v1462 = vpop.f32.mrb[0].mxu0
        %v1463 = vadd.f32 0.0, %v1462
        %v1464 = vpop.f32.mrb[0].mxu0
        %v1465 = vpop.f32.mrb[0].mxu0
        %v1466 = vadd.f32 0.0, %v1465
        %v1467 = vpop.f32.mrb[0].mxu0
        %1468 = vmatprep.mubr.bf16.mxu0 0
        %1469 = vmatmul.mubr.bf16.gmra.mrb[0].mxu0 %v1383
        %v1470 = vpop.f32.mrb[0].mxu0
        %v1471 = vadd.f32 0.0, %v1470
        %v1472 = vpop.f32.mrb[0].mxu0
        %v1473 = vpop.f32.mrb[0].mxu0
        %v1474 = vadd.f32 0.0, %v1473
        %v1475 = vpop.f32.mrb[0].mxu0
        %1476 = vmatprep.mubr.bf16.mxu0 0
        %1477 = vmatmul.mubr.bf16.gmra.mrb[0].mxu0 %v1386
        %v1478 = vpop.f32.mrb[0].mxu0
        %v1479 = vadd.f32 0.0, %v1478
        %v1480 = vpop.f32.mrb[0].mxu0
        %v1481 = vpop.f32.mrb[0].mxu0
        %v1482 = vadd.f32 0.0, %v1481
        %v1483 = vpop.f32.mrb[0].mxu0
        %1484 = vdwg.mxu0
        %v1485 = vsel %vm1165, %v1423, -1e+30
        %v1486 = vsel %vm1166, %v1426, -1e+30
        %v1487 = vsel %vm1167, %v1431, -1e+30
        %v1488 = vsel %vm1168, %v1434, -1e+30
        %v1489 = vsel %vm1169, %v1439, -1e+30
        %v1490 = vsel %vm1170, %v1442, -1e+30
        %v1491 = vsel %vm1171, %v1447, -1e+30
        %v1492 = vsel %vm1172, %v1450, -1e+30
        %v1493 = vsel %vm1173, %v1455, -1e+30
        %v1494 = vsel %vm1174, %v1458, -1e+30
        %v1495 = vsel %vm1175, %v1463, -1e+30
        %v1496 = vsel %vm1176, %v1466, -1e+30
        %v1497 = vsel %vm1177, %v1471, -1e+30
        %v1498 = vsel %vm1178, %v1474, -1e+30
        %v1499 = vsel %vm1179, %v1479, -1e+30
        %v1500 = vsel %vm1180, %v1482, -1e+30
        %v1501 = vmax.f32 %v1485, %v1489
        %v1502 = vmax.f32 %v1486, %v1490
        %v1503 = vmax.f32 %v1487, %v1491
        %v1504 = vmax.f32 %v1488, %v1492
        %v1505 = vmax.f32 %v1501, %v1493
        %v1506 = vmax.f32 %v1502, %v1494
        %v1507 = vmax.f32 %v1503, %v1495
        %v1508 = vmax.f32 %v1504, %v1496
        %v1509 = vmax.f32 %v1505, %v1497
        %v1510 = vmax.f32 %v1506, %v1498
        %v1511 = vmax.f32 %v1507, %v1499
        %v1512 = vmax.f32 %v1508, %v1500
        %v1513 = vmax.f32 %v1509, %v1510
        %v1514 = vmax.f32 %v1511, %v1512
        %v1515 = vmax.f32 %v1513, %v1514
        %v1516 = vrot.slane %v1515, 4
        %v1517 = vmax.f32 %v1515, %v1516
        %v1518 = vrot.slane %v1517, 2
        %v1519 = vmax.f32 %v1517, %v1518
        %v1520 = vrot.slane %v1519, 1
        %v1521 = vmax.f32 %v1519, %v1520
        %v1522 = vsub.f32 %v1485, %v1521
        %v1523 = vsub.f32 %v1486, %v1521
        %v1524 = vsub.f32 %v1487, %v1521
        %v1525 = vsub.f32 %v1488, %v1521
        %v1526 = vsub.f32 %v1489, %v1521
        %v1527 = vsub.f32 %v1490, %v1521
        %v1528 = vsub.f32 %v1491, %v1521
        %v1529 = vsub.f32 %v1492, %v1521
        %v1530 = vsub.f32 %v1493, %v1521
        %v1531 = vsub.f32 %v1494, %v1521
        %v1532 = vsub.f32 %v1495, %v1521
        %v1533 = vsub.f32 %v1496, %v1521
        %v1534 = vsub.f32 %v1497, %v1521
        %v1535 = vsub.f32 %v1498, %v1521
        %v1536 = vsub.f32 %v1499, %v1521
        %v1537 = vsub.f32 %v1500, %v1521
        %v1538 = vmul.f32 %v1522, 1.442695
        %v1539 = vpow.pop %v1538
        %v1540 = vmul.f32 %v1523, 1.442695
        %v1541 = vpow.pop %v1540
        %v1542 = vmul.f32 %v1524, 1.442695
        %v1543 = vpow.pop %v1542
        %v1544 = vmul.f32 %v1525, 1.442695
        %v1545 = vpow.pop %v1544
        %v1546 = vmul.f32 %v1526, 1.442695
        %v1547 = vpow.pop %v1546
        %v1548 = vmul.f32 %v1527, 1.442695
        %v1549 = vpow.pop %v1548
        %v1550 = vmul.f32 %v1528, 1.442695
        %v1551 = vpow.pop %v1550
        %v1552 = vmul.f32 %v1529, 1.442695
        %v1553 = vpow.pop %v1552
        %v1554 = vmul.f32 %v1530, 1.442695
        %v1555 = vpow.pop %v1554
        %v1556 = vmul.f32 %v1531, 1.442695
        %v1557 = vpow.pop %v1556
        %v1558 = vmul.f32 %v1532, 1.442695
        %v1559 = vpow.pop %v1558
        %v1560 = vmul.f32 %v1533, 1.442695
        %v1561 = vpow.pop %v1560
        %v1562 = vmul.f32 %v1534, 1.442695
        %v1563 = vpow.pop %v1562
        %v1564 = vmul.f32 %v1535, 1.442695
        %v1565 = vpow.pop %v1564
        %v1566 = vmul.f32 %v1536, 1.442695
        %v1567 = vpow.pop %v1566
        %v1568 = vmul.f32 %v1537, 1.442695
        %v1569 = vpow.pop %v1568
        %v1570 = vadd.f32 %v1539, %v1541
        %v1571 = vadd.f32 %v1570, %v1543
        %v1572 = vadd.f32 %v1571, %v1545
        %v1573 = vadd.f32 %v1572, %v1547
        %v1574 = vadd.f32 %v1573, %v1549
        %v1575 = vadd.f32 %v1574, %v1551
        %v1576 = vadd.f32 %v1575, %v1553
        %v1577 = vadd.f32 %v1576, %v1555
        %v1578 = vadd.f32 %v1577, %v1557
        %v1579 = vadd.f32 %v1578, %v1559
        %v1580 = vadd.f32 %v1579, %v1561
        %v1581 = vadd.f32 %v1580, %v1563
        %v1582 = vadd.f32 %v1581, %v1565
        %v1583 = vadd.f32 %v1582, %v1567
        %v1584 = vadd.f32 %v1583, %v1569
        %v1585 = vrot.slane %v1584, 4
        %v1586 = vadd.f32 %v1584, %v1585
        %v1587 = vrot.slane %v1586, 2
        %v1588 = vadd.f32 %v1586, %v1587
        %v1589 = vrot.slane %v1588, 1
        %v1590 = vadd.f32 %v1588, %v1589
        %v1591 = vpack.c.bf16 %v1541, %v1539
        %v1592 = vpack.c.bf16 %v1545, %v1543
        %v1593 = vpack.c.bf16 %v1549, %v1547
        %v1594 = vpack.c.bf16 %v1553, %v1551
        %v1595 = vpack.c.bf16 %v1557, %v1555
        %v1596 = vpack.c.bf16 %v1561, %v1559
        %v1597 = vpack.c.bf16 %v1565, %v1563
        %v1598 = vpack.c.bf16 %v1569, %v1567
        %1599 = vmatprep.subr.bf16.mxu0 0
        %1600 = vmatpush1.bf16.msra.mxu0 %v1591
        %1601 = vmatprep.subr.bf16.mxu0 0
        %1602 = vmatpush1.bf16.msra.mxu0 %v1592
        %1603 = vmatprep.subr.bf16.mxu0 0
        %1604 = vmatpush1.bf16.msra.mxu0 %v1593
        %1605 = vmatprep.subr.bf16.mxu0 0
        %1606 = vmatpush1.bf16.msra.mxu0 %v1594
        %1607 = vmatprep.subr.bf16.mxu0 0
        %1608 = vmatpush1.bf16.msra.mxu0 %v1595
        %1609 = vmatprep.subr.bf16.mxu0 0
        %1610 = vmatpush1.bf16.msra.mxu0 %v1596
        %1611 = vmatprep.subr.bf16.mxu0 0
        %1612 = vmatpush1.bf16.msra.mxu0 %v1597
        %1613 = vmatprep.subr.bf16.mxu0 0
        %1614 = vmatpush1.bf16.msra.mxu0 %v1598
        %1615 = vmatprep.subr.bf16.mxu0 0
        %1616 = vmatpush1.bf16.msra.mxu0 0
        %1617 = vmatprep.subr.bf16.mxu0 0
        %1618 = vmatpush1.bf16.msra.mxu0 0
        %1619 = vmatprep.subr.bf16.mxu0 0
        %1620 = vmatpush1.bf16.msra.mxu0 0
        %1621 = vmatprep.subr.bf16.mxu0 0
        %1622 = vmatpush1.bf16.msra.mxu0 0
        %1623 = vmatprep.subr.bf16.mxu0 0
        %1624 = vmatpush1.bf16.msra.mxu0 0
        %1625 = vmatprep.subr.bf16.mxu0 0
        %1626 = vmatpush1.bf16.msra.mxu0 0
        %1627 = vmatprep.subr.bf16.mxu0 0
        %1628 = vmatpush1.bf16.msra.mxu0 0
        %1629 = vmatprep.subr.bf16.mxu0 0
        %1630 = vmatpush1.bf16.msra.mxu0 0
        %1631 = vmatprep.mubr.bf16.mxu0 0
        %1632 = vmatmul.mubr.bf16.gmra.mrb[0].mxu0 %v975
        %v1633 = vpop.f32.mrb[0].mxu0
        %v1634 = vadd.f32 0.0, %v1633
        %v1635 = vpop.f32.mrb[0].mxu0
        %v1636 = vpop.f32.mrb[0].mxu0
        %v1637 = vadd.f32 0.0, %v1636
        %v1638 = vpop.f32.mrb[0].mxu0
        %1639 = vdwg.mxu0
        %v1640 = vrcp.pop %v1590
        %v1641 = vmul.f32 %v1634, %v1640
        %v1642 = vmul.f32 %v1637, %v1640
        %s1643 = scalar_lea.vmem %s9, 32
        %v1644 = vld [vmem:[%s1643] sm:$0xf]
        %v1645 = vld [vmem:[%s1643 + $0x4] sm:$0xf]
        %v1646 = vld [vmem:[%s1643 + $0x8] sm:$0xf]
        %v1647 = vld [vmem:[%s1643 + $0xc] sm:$0xf]
        %v1648 = vld [vmem:[%s1643 + $0x10] sm:$0xf]
        %v1649 = vld [vmem:[%s1643 + $0x14] sm:$0xf]
        %v1650 = vld [vmem:[%s1643 + $0x18] sm:$0xf]
        %v1651 = vld [vmem:[%s1643 + $0x1c] sm:$0xf]
        %v1652 = vpack.c.bf16 %v1642, %v1641
        %v1661 = vunpack.c.l.b16 %v1644
        %v1662 = vunpack.c.l.b16 %v1645
        %v1663 = vunpack.c.l.b16 %v1646
        %v1664 = vunpack.c.l.b16 %v1647
        %v1665 = vunpack.c.l.b16 %v1648
        %v1666 = vunpack.c.l.b16 %v1649
        %v1667 = vunpack.c.l.b16 %v1650
        %v1668 = vunpack.c.l.b16 %v1651
        %v1669 = vpack.c.b16 %v1662, %v1661
        %v1670 = vpack.c.b16 %v1664, %v1663
        %v1671 = vpack.c.b16 %v1666, %v1665
        %v1672 = vpack.c.b16 %v1668, %v1667
        %v1674 = vsel %vm1027, %v1669, 0
        %v1677 = vsel %vm1027, %v1670, 0
        %v1680 = vsel %vm1027, %v1671, 0
        %v1683 = vsel %vm1027, %v1672, 0
        %1685 = vmatprep.subr.bf16.mxu0 0
        %1686 = vmatpush1.bf16.msra.mxu0 %v1652
        %1687 = vmatprep.subr.bf16.mxu0 0
        %1688 = vmatpush1.bf16.msra.mxu0 0
        %1689 = vmatprep.subr.bf16.mxu0 0
        %1690 = vmatpush1.bf16.msra.mxu0 0
        %1691 = vmatprep.subr.bf16.mxu0 0
        %1692 = vmatpush1.bf16.msra.mxu0 0
        %1693 = vmatprep.subr.bf16.mxu0 0
        %1694 = vmatpush1.bf16.msra.mxu0 0
        %1695 = vmatprep.subr.bf16.mxu0 0
        %1696 = vmatpush1.bf16.msra.mxu0 0
        %1697 = vmatprep.subr.bf16.mxu0 0
        %1698 = vmatpush1.bf16.msra.mxu0 0
        %1699 = vmatprep.subr.bf16.mxu0 0
        %1700 = vmatpush1.bf16.msra.mxu0 0
        %1701 = vmatprep.subr.bf16.mxu0 0
        %1702 = vmatpush1.bf16.msra.mxu0 0
        %1703 = vmatprep.subr.bf16.mxu0 0
        %1704 = vmatpush1.bf16.msra.mxu0 0
        %1705 = vmatprep.subr.bf16.mxu0 0
        %1706 = vmatpush1.bf16.msra.mxu0 0
        %1707 = vmatprep.subr.bf16.mxu0 0
        %1708 = vmatpush1.bf16.msra.mxu0 0
        %1709 = vmatprep.subr.bf16.mxu0 0
        %1710 = vmatpush1.bf16.msra.mxu0 0
        %1711 = vmatprep.subr.bf16.mxu0 0
        %1712 = vmatpush1.bf16.msra.mxu0 0
        %1713 = vmatprep.subr.bf16.mxu0 0
        %1714 = vmatpush1.bf16.msra.mxu0 0
        %1715 = vmatprep.subr.bf16.mxu0 0
        %1716 = vmatpush1.bf16.msra.mxu0 0
        %1717 = vmatprep.mubr.bf16.mxu0 0
        %1718 = vmatmul.mubr.bf16.gmra.mrb[0].mxu0 %v1674
        %v1719 = vpop.f32.mrb[0].mxu0
        %v1720 = vadd.f32 0.0, %v1719
        %v1721 = vpop.f32.mrb[0].mxu0
        %v1722 = vpop.f32.mrb[0].mxu0
        %v1723 = vadd.f32 0.0, %v1722
        %v1724 = vpop.f32.mrb[0].mxu0
        %1725 = vmatprep.mubr.bf16.mxu0 0
        %1726 = vmatmul.mubr.bf16.gmra.mrb[0].mxu0 %v1677
        %v1727 = vpop.f32.mrb[0].mxu0
        %v1728 = vadd.f32 0.0, %v1727
        %v1729 = vpop.f32.mrb[0].mxu0
        %v1730 = vpop.f32.mrb[0].mxu0
        %v1731 = vadd.f32 0.0, %v1730
        %v1732 = vpop.f32.mrb[0].mxu0
        %1733 = vmatprep.mubr.bf16.mxu0 0
        %1734 = vmatmul.mubr.bf16.gmra.mrb[0].mxu0 %v1680
        %v1735 = vpop.f32.mrb[0].mxu0
        %v1736 = vadd.f32 0.0, %v1735
        %v1737 = vpop.f32.mrb[0].mxu0
        %v1738 = vpop.f32.mrb[0].mxu0
        %v1739 = vadd.f32 0.0, %v1738
        %v1740 = vpop.f32.mrb[0].mxu0
        %1741 = vmatprep.mubr.bf16.mxu0 0
        %1742 = vmatmul.mubr.bf16.gmra.mrb[0].mxu0 %v1683
        %v1743 = vpop.f32.mrb[0].mxu0
        %v1744 = vadd.f32 0.0, %v1743
        %v1745 = vpop.f32.mrb[0].mxu0
        %v1746 = vpop.f32.mrb[0].mxu0
        %v1747 = vadd.f32 0.0, %v1746
        %v1748 = vpop.f32.mrb[0].mxu0
        %1749 = vdwg.mxu0
        %v1758 = vunpack.c.l.b16 %v1339
        %v1759 = vunpack.c.l.b16 %v1340
        %v1760 = vunpack.c.l.b16 %v1341
        %v1761 = vunpack.c.l.b16 %v1342
        %v1762 = vunpack.c.l.b16 %v1343
        %v1763 = vunpack.c.l.b16 %v1344
        %v1764 = vunpack.c.l.b16 %v1345
        %v1765 = vunpack.c.l.b16 %v1346
        %v1766 = vpack.c.b16 %v1759, %v1758
        %v1767 = vpack.c.b16 %v1761, %v1760
        %v1768 = vpack.c.b16 %v1763, %v1762
        %v1769 = vpack.c.b16 %v1765, %v1764
        %v1771 = vsel %vm1027, %v1766, 0
        %v1774 = vsel %vm1027, %v1767, 0
        %v1777 = vsel %vm1027, %v1768, 0
        %v1780 = vsel %vm1027, %v1769, 0
        %1782 = vmatprep.subr.bf16.mxu0 0
        %1783 = vmatpush1.bf16.msra.mxu0 %v1347
        %1784 = vmatprep.subr.bf16.mxu0 0
        %1785 = vmatpush1.bf16.msra.mxu0 0
        %1786 = vmatprep.subr.bf16.mxu0 0
        %1787 = vmatpush1.bf16.msra.mxu0 0
        %1788 = vmatprep.subr.bf16.mxu0 0
        %1789 = vmatpush1.bf16.msra.mxu0 0
        %1790 = vmatprep.subr.bf16.mxu0 0
        %1791 = vmatpush1.bf16.msra.mxu0 0
        %1792 = vmatprep.subr.bf16.mxu0 0
        %1793 = vmatpush1.bf16.msra.mxu0 0
        %1794 = vmatprep.subr.bf16.mxu0 0
        %1795 = vmatpush1.bf16.msra.mxu0 0
        %1796 = vmatprep.subr.bf16.mxu0 0
        %1797 = vmatpush1.bf16.msra.mxu0 0
        %1798 = vmatprep.subr.bf16.mxu0 0
        %1799 = vmatpush1.bf16.msra.mxu0 0
        %1800 = vmatprep.subr.bf16.mxu0 0
        %1801 = vmatpush1.bf16.msra.mxu0 0
        %1802 = vmatprep.subr.bf16.mxu0 0
        %1803 = vmatpush1.bf16.msra.mxu0 0
        %1804 = vmatprep.subr.bf16.mxu0 0
        %1805 = vmatpush1.bf16.msra.mxu0 0
        %1806 = vmatprep.subr.bf16.mxu0 0
        %1807 = vmatpush1.bf16.msra.mxu0 0
        %1808 = vmatprep.subr.bf16.mxu0 0
        %1809 = vmatpush1.bf16.msra.mxu0 0
        %1810 = vmatprep.subr.bf16.mxu0 0
        %1811 = vmatpush1.bf16.msra.mxu0 0
        %1812 = vmatprep.subr.bf16.mxu0 0
        %1813 = vmatpush1.bf16.msra.mxu0 0
        %1814 = vmatprep.mubr.bf16.mxu0 0
        %1815 = vmatmul.mubr.bf16.gmra.mrb[0].mxu0 %v1771
        %v1816 = vpop.f32.mrb[0].mxu0
        %v1817 = vadd.f32 %v1720, %v1816
        %v1818 = vpop.f32.mrb[0].mxu0
        %v1819 = vpop.f32.mrb[0].mxu0
        %v1820 = vadd.f32 %v1723, %v1819
        %v1821 = vpop.f32.mrb[0].mxu0
        %1822 = vmatprep.mubr.bf16.mxu0 0
        %1823 = vmatmul.mubr.bf16.gmra.mrb[0].mxu0 %v1774
        %v1824 = vpop.f32.mrb[0].mxu0
        %v1825 = vadd.f32 %v1728, %v1824
        %v1826 = vpop.f32.mrb[0].mxu0
        %v1827 = vpop.f32.mrb[0].mxu0
        %v1828 = vadd.f32 %v1731, %v1827
        %v1829 = vpop.f32.mrb[0].mxu0
        %1830 = vmatprep.mubr.bf16.mxu0 0
        %1831 = vmatmul.mubr.bf16.gmra.mrb[0].mxu0 %v1777
        %v1832 = vpop.f32.mrb[0].mxu0
        %v1833 = vadd.f32 %v1736, %v1832
        %v1834 = vpop.f32.mrb[0].mxu0
        %v1835 = vpop.f32.mrb[0].mxu0
        %v1836 = vadd.f32 %v1739, %v1835
        %v1837 = vpop.f32.mrb[0].mxu0
        %1838 = vmatprep.mubr.bf16.mxu0 0
        %1839 = vmatmul.mubr.bf16.gmra.mrb[0].mxu0 %v1780
        %v1840 = vpop.f32.mrb[0].mxu0
        %v1841 = vadd.f32 %v1744, %v1840
        %v1842 = vpop.f32.mrb[0].mxu0
        %v1843 = vpop.f32.mrb[0].mxu0
        %v1844 = vadd.f32 %v1747, %v1843
        %v1845 = vpop.f32.mrb[0].mxu0
        %1846 = vdwg.mxu0
        %1847 = vxpose.xlu0.c.b16.start [1/8] %v819, 128
        %1848 = vxpose.xlu0.c.b16.cont [2/8] 0, 128
        %1849 = vxpose.xlu0.c.b16.cont [3/8] 0, 128
        %1850 = vxpose.xlu0.c.b16.cont [4/8] 0, 128
        %1851 = vxpose.xlu0.c.b16.cont [5/8] 0, 128
        %1852 = vxpose.xlu0.c.b16.cont [6/8] 0, 128
        %1853 = vxpose.xlu0.c.b16.cont [7/8] 0, 128
        %1854 = vxpose.xlu0.c.b16.end [8/8] 0, 128
        %v1855 = vpop.trf.xlu0
        %v1856 = vpop.trf.xlu0
        %v1857 = vpop.trf.xlu0
        %v1858 = vpop.trf.xlu0
        %v1859 = vpop.trf.xlu0
        %v1860 = vpop.trf.xlu0
        %v1861 = vpop.trf.xlu0
        %v1862 = vpop.trf.xlu0
        %v1864 = vsel %vm1027, %v1855, 0
        %v1867 = vsel %vm1027, %v1856, 0
        %v1870 = vsel %vm1027, %v1857, 0
        %v1873 = vsel %vm1027, %v1858, 0
        %v1876 = vsel %vm1027, %v1859, 0
        %v1879 = vsel %vm1027, %v1860, 0
        %v1882 = vsel %vm1027, %v1861, 0
        %v1885 = vsel %vm1027, %v1862, 0
        %1887 = vmatprep.subr.bf16.mxu0 0
        %1888 = vmatpush1.bf16.msra.mxu0 %v662
        %1889 = vmatprep.subr.bf16.mxu0 0
        %1890 = vmatpush1.bf16.msra.mxu0 0
        %1891 = vmatprep.subr.bf16.mxu0 0
        %1892 = vmatpush1.bf16.msra.mxu0 0
        %1893 = vmatprep.subr.bf16.mxu0 0
        %1894 = vmatpush1.bf16.msra.mxu0 0
        %1895 = vmatprep.subr.bf16.mxu0 0
        %1896 = vmatpush1.bf16.msra.mxu0 0
        %1897 = vmatprep.subr.bf16.mxu0 0
        %1898 = vmatpush1.bf16.msra.mxu0 0
        %1899 = vmatprep.subr.bf16.mxu0 0
        %1900 = vmatpush1.bf16.msra.mxu0 0
        %1901 = vmatprep.subr.bf16.mxu0 0
        %1902 = vmatpush1.bf16.msra.mxu0 0
        %1903 = vmatprep.subr.bf16.mxu0 0
        %1904 = vmatpush1.bf16.msra.mxu0 0
        %1905 = vmatprep.subr.bf16.mxu0 0
        %1906 = vmatpush1.bf16.msra.mxu0 0
        %1907 = vmatprep.subr.bf16.mxu0 0
        %1908 = vmatpush1.bf16.msra.mxu0 0
        %1909 = vmatprep.subr.bf16.mxu0 0
        %1910 = vmatpush1.bf16.msra.mxu0 0
        %1911 = vmatprep.subr.bf16.mxu0 0
        %1912 = vmatpush1.bf16.msra.mxu0 0
        %1913 = vmatprep.subr.bf16.mxu0 0
        %1914 = vmatpush1.bf16.msra.mxu0 0
        %1915 = vmatprep.subr.bf16.mxu0 0
        %1916 = vmatpush1.bf16.msra.mxu0 0
        %1917 = vmatprep.subr.bf16.mxu0 0
        %1918 = vmatpush1.bf16.msra.mxu0 0
        %1919 = vmatprep.mubr.bf16.mxu0 0
        %1920 = vmatmul.mubr.bf16.gmra.mrb[0].mxu0 %v1864
        %v1921 = vpop.f32.mrb[0].mxu0
        %v1922 = vadd.f32 0.0, %v1921
        %v1923 = vpop.f32.mrb[0].mxu0
        %v1924 = vpop.f32.mrb[0].mxu0
        %v1925 = vadd.f32 0.0, %v1924
        %v1926 = vpop.f32.mrb[0].mxu0
        %1927 = vmatprep.mubr.bf16.mxu0 0
        %1928 = vmatmul.mubr.bf16.gmra.mrb[0].mxu0 %v1867
        %v1929 = vpop.f32.mrb[0].mxu0
        %v1930 = vadd.f32 0.0, %v1929
        %v1931 = vpop.f32.mrb[0].mxu0
        %v1932 = vpop.f32.mrb[0].mxu0
        %v1933 = vadd.f32 0.0, %v1932
        %v1934 = vpop.f32.mrb[0].mxu0
        %1935 = vmatprep.mubr.bf16.mxu0 0
        %1936 = vmatmul.mubr.bf16.gmra.mrb[0].mxu0 %v1870
        %v1937 = vpop.f32.mrb[0].mxu0
        %v1938 = vadd.f32 0.0, %v1937
        %v1939 = vpop.f32.mrb[0].mxu0
        %v1940 = vpop.f32.mrb[0].mxu0
        %v1941 = vadd.f32 0.0, %v1940
        %v1942 = vpop.f32.mrb[0].mxu0
        %1943 = vmatprep.mubr.bf16.mxu0 0
        %1944 = vmatmul.mubr.bf16.gmra.mrb[0].mxu0 %v1873
        %v1945 = vpop.f32.mrb[0].mxu0
        %v1946 = vadd.f32 0.0, %v1945
        %v1947 = vpop.f32.mrb[0].mxu0
        %v1948 = vpop.f32.mrb[0].mxu0
        %v1949 = vadd.f32 0.0, %v1948
        %v1950 = vpop.f32.mrb[0].mxu0
        %1951 = vmatprep.mubr.bf16.mxu0 0
        %1952 = vmatmul.mubr.bf16.gmra.mrb[0].mxu0 %v1876
        %v1953 = vpop.f32.mrb[0].mxu0
        %v1954 = vadd.f32 0.0, %v1953
        %v1955 = vpop.f32.mrb[0].mxu0
        %v1956 = vpop.f32.mrb[0].mxu0
        %v1957 = vadd.f32 0.0, %v1956
        %v1958 = vpop.f32.mrb[0].mxu0
        %1959 = vmatprep.mubr.bf16.mxu0 0
        %1960 = vmatmul.mubr.bf16.gmra.mrb[0].mxu0 %v1879
        %v1961 = vpop.f32.mrb[0].mxu0
        %v1962 = vadd.f32 0.0, %v1961
        %v1963 = vpop.f32.mrb[0].mxu0
        %v1964 = vpop.f32.mrb[0].mxu0
        %v1965 = vadd.f32 0.0, %v1964
        %v1966 = vpop.f32.mrb[0].mxu0
        %1967 = vmatprep.mubr.bf16.mxu0 0
        %1968 = vmatmul.mubr.bf16.gmra.mrb[0].mxu0 %v1882
        %v1969 = vpop.f32.mrb[0].mxu0
        %v1970 = vadd.f32 0.0, %v1969
        %v1971 = vpop.f32.mrb[0].mxu0
        %v1972 = vpop.f32.mrb[0].mxu0
        %v1973 = vadd.f32 0.0, %v1972
        %v1974 = vpop.f32.mrb[0].mxu0
        %1975 = vmatprep.mubr.bf16.mxu0 0
        %1976 = vmatmul.mubr.bf16.gmra.mrb[0].mxu0 %v1885
        %v1977 = vpop.f32.mrb[0].mxu0
        %v1978 = vadd.f32 0.0, %v1977
        %v1979 = vpop.f32.mrb[0].mxu0
        %v1980 = vpop.f32.mrb[0].mxu0
        %v1981 = vadd.f32 0.0, %v1980
        %v1982 = vpop.f32.mrb[0].mxu0
        %1983 = vdwg.mxu0
        %v1984 = vsel %vm1165, %v1922, -1e+30
        %v1985 = vsel %vm1166, %v1925, -1e+30
        %v1986 = vsel %vm1167, %v1930, -1e+30
        %v1987 = vsel %vm1168, %v1933, -1e+30
        %v1988 = vsel %vm1169, %v1938, -1e+30
        %v1989 = vsel %vm1170, %v1941, -1e+30
        %v1990 = vsel %vm1171, %v1946, -1e+30
        %v1991 = vsel %vm1172, %v1949, -1e+30
        %v1992 = vsel %vm1173, %v1954, -1e+30
        %v1993 = vsel %vm1174, %v1957, -1e+30
        %v1994 = vsel %vm1175, %v1962, -1e+30
        %v1995 = vsel %vm1176, %v1965, -1e+30
        %v1996 = vsel %vm1177, %v1970, -1e+30
        %v1997 = vsel %vm1178, %v1973, -1e+30
        %v1998 = vsel %vm1179, %v1978, -1e+30
        %v1999 = vsel %vm1180, %v1981, -1e+30
        %v2000 = vmax.f32 %v1984, %v1988
        %v2001 = vmax.f32 %v1985, %v1989
        %v2002 = vmax.f32 %v1986, %v1990
        %v2003 = vmax.f32 %v1987, %v1991
        %v2004 = vmax.f32 %v2000, %v1992
        %v2005 = vmax.f32 %v2001, %v1993
        %v2006 = vmax.f32 %v2002, %v1994
        %v2007 = vmax.f32 %v2003, %v1995
        %v2008 = vmax.f32 %v2004, %v1996
        %v2009 = vmax.f32 %v2005, %v1997
        %v2010 = vmax.f32 %v2006, %v1998
        %v2011 = vmax.f32 %v2007, %v1999
        %v2012 = vmax.f32 %v2008, %v2009
        %v2013 = vmax.f32 %v2010, %v2011
        %v2014 = vmax.f32 %v2012, %v2013
        %v2015 = vrot.slane %v2014, 4
        %v2016 = vmax.f32 %v2014, %v2015
        %v2017 = vrot.slane %v2016, 2
        %v2018 = vmax.f32 %v2016, %v2017
        %v2019 = vrot.slane %v2018, 1
        %v2020 = vmax.f32 %v2018, %v2019
        %v2021 = vsub.f32 %v1984, %v2020
        %v2022 = vsub.f32 %v1985, %v2020
        %v2023 = vsub.f32 %v1986, %v2020
        %v2024 = vsub.f32 %v1987, %v2020
        %v2025 = vsub.f32 %v1988, %v2020
        %v2026 = vsub.f32 %v1989, %v2020
        %v2027 = vsub.f32 %v1990, %v2020
        %v2028 = vsub.f32 %v1991, %v2020
        %v2029 = vsub.f32 %v1992, %v2020
        %v2030 = vsub.f32 %v1993, %v2020
        %v2031 = vsub.f32 %v1994, %v2020
        %v2032 = vsub.f32 %v1995, %v2020
        %v2033 = vsub.f32 %v1996, %v2020
        %v2034 = vsub.f32 %v1997, %v2020
        %v2035 = vsub.f32 %v1998, %v2020
        %v2036 = vsub.f32 %v1999, %v2020
        %v2037 = vmul.f32 %v2021, 1.442695
        %v2038 = vpow.pop %v2037
        %v2039 = vmul.f32 %v2022, 1.442695
        %v2040 = vpow.pop %v2039
        %v2041 = vmul.f32 %v2023, 1.442695
        %v2042 = vpow.pop %v2041
        %v2043 = vmul.f32 %v2024, 1.442695
        %v2044 = vpow.pop %v2043
        %v2045 = vmul.f32 %v2025, 1.442695
        %v2046 = vpow.pop %v2045
        %v2047 = vmul.f32 %v2026, 1.442695
        %v2048 = vpow.pop %v2047
        %v2049 = vmul.f32 %v2027, 1.442695
        %v2050 = vpow.pop %v2049
        %v2051 = vmul.f32 %v2028, 1.442695
        %v2052 = vpow.pop %v2051
        %v2053 = vmul.f32 %v2029, 1.442695
        %v2054 = vpow.pop %v2053
        %v2055 = vmul.f32 %v2030, 1.442695
        %v2056 = vpow.pop %v2055
        %v2057 = vmul.f32 %v2031, 1.442695
        %v2058 = vpow.pop %v2057
        %v2059 = vmul.f32 %v2032, 1.442695
        %v2060 = vpow.pop %v2059
        %v2061 = vmul.f32 %v2033, 1.442695
        %v2062 = vpow.pop %v2061
        %v2063 = vmul.f32 %v2034, 1.442695
        %v2064 = vpow.pop %v2063
        %v2065 = vmul.f32 %v2035, 1.442695
        %v2066 = vpow.pop %v2065
        %v2067 = vmul.f32 %v2036, 1.442695
        %v2068 = vpow.pop %v2067
        %v2069 = vadd.f32 %v2038, %v2040
        %v2070 = vadd.f32 %v2069, %v2042
        %v2071 = vadd.f32 %v2070, %v2044
        %v2072 = vadd.f32 %v2071, %v2046
        %v2073 = vadd.f32 %v2072, %v2048
        %v2074 = vadd.f32 %v2073, %v2050
        %v2075 = vadd.f32 %v2074, %v2052
        %v2076 = vadd.f32 %v2075, %v2054
        %v2077 = vadd.f32 %v2076, %v2056
        %v2078 = vadd.f32 %v2077, %v2058
        %v2079 = vadd.f32 %v2078, %v2060
        %v2080 = vadd.f32 %v2079, %v2062
        %v2081 = vadd.f32 %v2080, %v2064
        %v2082 = vadd.f32 %v2081, %v2066
        %v2083 = vadd.f32 %v2082, %v2068
        %v2084 = vrot.slane %v2083, 4
        %v2085 = vadd.f32 %v2083, %v2084
        %v2086 = vrot.slane %v2085, 2
        %v2087 = vadd.f32 %v2085, %v2086
        %v2088 = vrot.slane %v2087, 1
        %v2089 = vadd.f32 %v2087, %v2088
        %v2090 = vpack.c.bf16 %v2040, %v2038
        %v2091 = vpack.c.bf16 %v2044, %v2042
        %v2092 = vpack.c.bf16 %v2048, %v2046
        %v2093 = vpack.c.bf16 %v2052, %v2050
        %v2094 = vpack.c.bf16 %v2056, %v2054
        %v2095 = vpack.c.bf16 %v2060, %v2058
        %v2096 = vpack.c.bf16 %v2064, %v2062
        %v2097 = vpack.c.bf16 %v2068, %v2066
        %2098 = vmatprep.subr.bf16.mxu0 0
        %2099 = vmatpush1.bf16.msra.mxu0 %v2090
        %2100 = vmatprep.subr.bf16.mxu0 0
        %2101 = vmatpush1.bf16.msra.mxu0 %v2091
        %2102 = vmatprep.subr.bf16.mxu0 0
        %2103 = vmatpush1.bf16.msra.mxu0 %v2092
        %2104 = vmatprep.subr.bf16.mxu0 0
        %2105 = vmatpush1.bf16.msra.mxu0 %v2093
        %2106 = vmatprep.subr.bf16.mxu0 0
        %2107 = vmatpush1.bf16.msra.mxu0 %v2094
        %2108 = vmatprep.subr.bf16.mxu0 0
        %2109 = vmatpush1.bf16.msra.mxu0 %v2095
        %2110 = vmatprep.subr.bf16.mxu0 0
        %2111 = vmatpush1.bf16.msra.mxu0 %v2096
        %2112 = vmatprep.subr.bf16.mxu0 0
        %2113 = vmatpush1.bf16.msra.mxu0 %v2097
        %2114 = vmatprep.subr.bf16.mxu0 0
        %2115 = vmatpush1.bf16.msra.mxu0 0
        %2116 = vmatprep.subr.bf16.mxu0 0
        %2117 = vmatpush1.bf16.msra.mxu0 0
        %2118 = vmatprep.subr.bf16.mxu0 0
        %2119 = vmatpush1.bf16.msra.mxu0 0
        %2120 = vmatprep.subr.bf16.mxu0 0
        %2121 = vmatpush1.bf16.msra.mxu0 0
        %2122 = vmatprep.subr.bf16.mxu0 0
        %2123 = vmatpush1.bf16.msra.mxu0 0
        %2124 = vmatprep.subr.bf16.mxu0 0
        %2125 = vmatpush1.bf16.msra.mxu0 0
        %2126 = vmatprep.subr.bf16.mxu0 0
        %2127 = vmatpush1.bf16.msra.mxu0 0
        %2128 = vmatprep.subr.bf16.mxu0 0
        %2129 = vmatpush1.bf16.msra.mxu0 0
        %2130 = vmatprep.mubr.bf16.mxu0 0
        %2131 = vmatmul.mubr.bf16.gmra.mrb[0].mxu0 %v976
        %v2132 = vpop.f32.mrb[0].mxu0
        %v2133 = vadd.f32 0.0, %v2132
        %v2134 = vpop.f32.mrb[0].mxu0
        %v2135 = vpop.f32.mrb[0].mxu0
        %v2136 = vadd.f32 0.0, %v2135
        %v2137 = vpop.f32.mrb[0].mxu0
        %2138 = vdwg.mxu0
        %v2139 = vrcp.pop %v2089
        %v2140 = vmul.f32 %v2133, %v2139
        %v2141 = vmul.f32 %v2136, %v2139
        %s2142 = scalar_lea.vmem %s9, 64
        %v2143 = vld [vmem:[%s2142] sm:$0xf]
        %v2144 = vld [vmem:[%s2142 + $0x4] sm:$0xf]
        %v2145 = vld [vmem:[%s2142 + $0x8] sm:$0xf]
        %v2146 = vld [vmem:[%s2142 + $0xc] sm:$0xf]
        %v2147 = vld [vmem:[%s2142 + $0x10] sm:$0xf]
        %v2148 = vld [vmem:[%s2142 + $0x14] sm:$0xf]
        %v2149 = vld [vmem:[%s2142 + $0x18] sm:$0xf]
        %v2150 = vld [vmem:[%s2142 + $0x1c] sm:$0xf]
        %v2151 = vpack.c.bf16 %v2141, %v2140
        %v2160 = vunpack.c.l.b16 %v2143
        %v2161 = vunpack.c.l.b16 %v2144
        %v2162 = vunpack.c.l.b16 %v2145
        %v2163 = vunpack.c.l.b16 %v2146
        %v2164 = vunpack.c.l.b16 %v2147
        %v2165 = vunpack.c.l.b16 %v2148
        %v2166 = vunpack.c.l.b16 %v2149
        %v2167 = vunpack.c.l.b16 %v2150
        %v2168 = vpack.c.b16 %v2161, %v2160
        %v2169 = vpack.c.b16 %v2163, %v2162
        %v2170 = vpack.c.b16 %v2165, %v2164
        %v2171 = vpack.c.b16 %v2167, %v2166
        %v2173 = vsel %vm1027, %v2168, 0
        %v2176 = vsel %vm1027, %v2169, 0
        %v2179 = vsel %vm1027, %v2170, 0
        %v2182 = vsel %vm1027, %v2171, 0
        %2184 = vmatprep.subr.bf16.mxu0 0
        %2185 = vmatpush1.bf16.msra.mxu0 %v2151
        %2186 = vmatprep.subr.bf16.mxu0 0
        %2187 = vmatpush1.bf16.msra.mxu0 0
        %2188 = vmatprep.subr.bf16.mxu0 0
        %2189 = vmatpush1.bf16.msra.mxu0 0
        %2190 = vmatprep.subr.bf16.mxu0 0
        %2191 = vmatpush1.bf16.msra.mxu0 0
        %2192 = vmatprep.subr.bf16.mxu0 0
        %2193 = vmatpush1.bf16.msra.mxu0 0
        %2194 = vmatprep.subr.bf16.mxu0 0
        %2195 = vmatpush1.bf16.msra.mxu0 0
        %2196 = vmatprep.subr.bf16.mxu0 0
        %2197 = vmatpush1.bf16.msra.mxu0 0
        %2198 = vmatprep.subr.bf16.mxu0 0
        %2199 = vmatpush1.bf16.msra.mxu0 0
        %2200 = vmatprep.subr.bf16.mxu0 0
        %2201 = vmatpush1.bf16.msra.mxu0 0
        %2202 = vmatprep.subr.bf16.mxu0 0
        %2203 = vmatpush1.bf16.msra.mxu0 0
        %2204 = vmatprep.subr.bf16.mxu0 0
        %2205 = vmatpush1.bf16.msra.mxu0 0
        %2206 = vmatprep.subr.bf16.mxu0 0
        %2207 = vmatpush1.bf16.msra.mxu0 0
        %2208 = vmatprep.subr.bf16.mxu0 0
        %2209 = vmatpush1.bf16.msra.mxu0 0
        %2210 = vmatprep.subr.bf16.mxu0 0
        %2211 = vmatpush1.bf16.msra.mxu0 0
        %2212 = vmatprep.subr.bf16.mxu0 0
        %2213 = vmatpush1.bf16.msra.mxu0 0
        %2214 = vmatprep.subr.bf16.mxu0 0
        %2215 = vmatpush1.bf16.msra.mxu0 0
        %2216 = vmatprep.mubr.bf16.mxu0 0
        %2217 = vmatmul.mubr.bf16.gmra.mrb[0].mxu0 %v2173
        %v2218 = vpop.f32.mrb[0].mxu0
        %v2219 = vadd.f32 0.0, %v2218
        %v2220 = vpop.f32.mrb[0].mxu0
        %v2221 = vpop.f32.mrb[0].mxu0
        %v2222 = vadd.f32 0.0, %v2221
        %v2223 = vpop.f32.mrb[0].mxu0
        %2224 = vmatprep.mubr.bf16.mxu0 0
        %2225 = vmatmul.mubr.bf16.gmra.mrb[0].mxu0 %v2176
        %v2226 = vpop.f32.mrb[0].mxu0
        %v2227 = vadd.f32 0.0, %v2226
        %v2228 = vpop.f32.mrb[0].mxu0
        %v2229 = vpop.f32.mrb[0].mxu0
        %v2230 = vadd.f32 0.0, %v2229
        %v2231 = vpop.f32.mrb[0].mxu0
        %2232 = vmatprep.mubr.bf16.mxu0 0
        %2233 = vmatmul.mubr.bf16.gmra.mrb[0].mxu0 %v2179
        %v2234 = vpop.f32.mrb[0].mxu0
        %v2235 = vadd.f32 0.0, %v2234
        %v2236 = vpop.f32.mrb[0].mxu0
        %v2237 = vpop.f32.mrb[0].mxu0
        %v2238 = vadd.f32 0.0, %v2237
        %v2239 = vpop.f32.mrb[0].mxu0
        %2240 = vmatprep.mubr.bf16.mxu0 0
        %2241 = vmatmul.mubr.bf16.gmra.mrb[0].mxu0 %v2182
        %v2242 = vpop.f32.mrb[0].mxu0
        %v2243 = vadd.f32 0.0, %v2242
        %v2244 = vpop.f32.mrb[0].mxu0
        %v2245 = vpop.f32.mrb[0].mxu0
        %v2246 = vadd.f32 0.0, %v2245
        %v2247 = vpop.f32.mrb[0].mxu0
        %2248 = vdwg.mxu0
        %v2249 = vadd.f32 %v1817, %v2219
        %v2250 = vadd.f32 %v1820, %v2222
        %v2251 = vadd.f32 %v1825, %v2227
        %v2252 = vadd.f32 %v1828, %v2230
        %v2253 = vadd.f32 %v1833, %v2235
        %v2254 = vadd.f32 %v1836, %v2238
        %v2255 = vadd.f32 %v1841, %v2243
        %v2256 = vadd.f32 %v1844, %v2246
        %2257 = vxpose.xlu0.c.b16.start [1/8] %v820, 128
        %2258 = vxpose.xlu0.c.b16.cont [2/8] 0, 128
        %2259 = vxpose.xlu0.c.b16.cont [3/8] 0, 128
        %2260 = vxpose.xlu0.c.b16.cont [4/8] 0, 128
        %2261 = vxpose.xlu0.c.b16.cont [5/8] 0, 128
        %2262 = vxpose.xlu0.c.b16.cont [6/8] 0, 128
        %2263 = vxpose.xlu0.c.b16.cont [7/8] 0, 128
        %2264 = vxpose.xlu0.c.b16.end [8/8] 0, 128
        %v2265 = vpop.trf.xlu0
        %v2266 = vpop.trf.xlu0
        %v2267 = vpop.trf.xlu0
        %v2268 = vpop.trf.xlu0
        %v2269 = vpop.trf.xlu0
        %v2270 = vpop.trf.xlu0
        %v2271 = vpop.trf.xlu0
        %v2272 = vpop.trf.xlu0
        %v2274 = vsel %vm1027, %v2265, 0
        %v2277 = vsel %vm1027, %v2266, 0
        %v2280 = vsel %vm1027, %v2267, 0
        %v2283 = vsel %vm1027, %v2268, 0
        %v2286 = vsel %vm1027, %v2269, 0
        %v2289 = vsel %vm1027, %v2270, 0
        %v2292 = vsel %vm1027, %v2271, 0
        %v2295 = vsel %vm1027, %v2272, 0
        %2297 = vmatprep.subr.bf16.mxu0 0
        %2298 = vmatpush1.bf16.msra.mxu0 %v663
        %2299 = vmatprep.subr.bf16.mxu0 0
        %2300 = vmatpush1.bf16.msra.mxu0 0
        %2301 = vmatprep.subr.bf16.mxu0 0
        %2302 = vmatpush1.bf16.msra.mxu0 0
        %2303 = vmatprep.subr.bf16.mxu0 0
        %2304 = vmatpush1.bf16.msra.mxu0 0
        %2305 = vmatprep.subr.bf16.mxu0 0
        %2306 = vmatpush1.bf16.msra.mxu0 0
        %2307 = vmatprep.subr.bf16.mxu0 0
        %2308 = vmatpush1.bf16.msra.mxu0 0
        %2309 = vmatprep.subr.bf16.mxu0 0
        %2310 = vmatpush1.bf16.msra.mxu0 0
        %2311 = vmatprep.subr.bf16.mxu0 0
        %2312 = vmatpush1.bf16.msra.mxu0 0
        %2313 = vmatprep.subr.bf16.mxu0 0
        %2314 = vmatpush1.bf16.msra.mxu0 0
        %2315 = vmatprep.subr.bf16.mxu0 0
        %2316 = vmatpush1.bf16.msra.mxu0 0
        %2317 = vmatprep.subr.bf16.mxu0 0
        %2318 = vmatpush1.bf16.msra.mxu0 0
        %2319 = vmatprep.subr.bf16.mxu0 0
        %2320 = vmatpush1.bf16.msra.mxu0 0
        %2321 = vmatprep.subr.bf16.mxu0 0
        %2322 = vmatpush1.bf16.msra.mxu0 0
        %2323 = vmatprep.subr.bf16.mxu0 0
        %2324 = vmatpush1.bf16.msra.mxu0 0
        %2325 = vmatprep.subr.bf16.mxu0 0
        %2326 = vmatpush1.bf16.msra.mxu0 0
        %2327 = vmatprep.subr.bf16.mxu0 0
        %2328 = vmatpush1.bf16.msra.mxu0 0
        %2329 = vmatprep.mubr.bf16.mxu0 0
        %2330 = vmatmul.mubr.bf16.gmra.mrb[0].mxu0 %v2274
        %v2331 = vpop.f32.mrb[0].mxu0
        %v2332 = vadd.f32 0.0, %v2331
        %v2333 = vpop.f32.mrb[0].mxu0
        %v2334 = vpop.f32.mrb[0].mxu0
        %v2335 = vadd.f32 0.0, %v2334
        %v2336 = vpop.f32.mrb[0].mxu0
        %2337 = vmatprep.mubr.bf16.mxu0 0
        %2338 = vmatmul.mubr.bf16.gmra.mrb[0].mxu0 %v2277
        %v2339 = vpop.f32.mrb[0].mxu0
        %v2340 = vadd.f32 0.0, %v2339
        %v2341 = vpop.f32.mrb[0].mxu0
        %v2342 = vpop.f32.mrb[0].mxu0
        %v2343 = vadd.f32 0.0, %v2342
        %v2344 = vpop.f32.mrb[0].mxu0
        %2345 = vmatprep.mubr.bf16.mxu0 0
        %2346 = vmatmul.mubr.bf16.gmra.mrb[0].mxu0 %v2280
        %v2347 = vpop.f32.mrb[0].mxu0
        %v2348 = vadd.f32 0.0, %v2347
        %v2349 = vpop.f32.mrb[0].mxu0
        %v2350 = vpop.f32.mrb[0].mxu0
        %v2351 = vadd.f32 0.0, %v2350
        %v2352 = vpop.f32.mrb[0].mxu0
        %2353 = vmatprep.mubr.bf16.mxu0 0
        %2354 = vmatmul.mubr.bf16.gmra.mrb[0].mxu0 %v2283
        %v2355 = vpop.f32.mrb[0].mxu0
        %v2356 = vadd.f32 0.0, %v2355
        %v2357 = vpop.f32.mrb[0].mxu0
        %v2358 = vpop.f32.mrb[0].mxu0
        %v2359 = vadd.f32 0.0, %v2358
        %v2360 = vpop.f32.mrb[0].mxu0
        %2361 = vmatprep.mubr.bf16.mxu0 0
        %2362 = vmatmul.mubr.bf16.gmra.mrb[0].mxu0 %v2286
        %v2363 = vpop.f32.mrb[0].mxu0
        %v2364 = vadd.f32 0.0, %v2363
        %v2365 = vpop.f32.mrb[0].mxu0
        %v2366 = vpop.f32.mrb[0].mxu0
        %v2367 = vadd.f32 0.0, %v2366
        %v2368 = vpop.f32.mrb[0].mxu0
        %2369 = vmatprep.mubr.bf16.mxu0 0
        %2370 = vmatmul.mubr.bf16.gmra.mrb[0].mxu0 %v2289
        %v2371 = vpop.f32.mrb[0].mxu0
        %v2372 = vadd.f32 0.0, %v2371
        %v2373 = vpop.f32.mrb[0].mxu0
        %v2374 = vpop.f32.mrb[0].mxu0
        %v2375 = vadd.f32 0.0, %v2374
        %v2376 = vpop.f32.mrb[0].mxu0
        %2377 = vmatprep.mubr.bf16.mxu0 0
        %2378 = vmatmul.mubr.bf16.gmra.mrb[0].mxu0 %v2292
        %v2379 = vpop.f32.mrb[0].mxu0
        %v2380 = vadd.f32 0.0, %v2379
        %v2381 = vpop.f32.mrb[0].mxu0
        %v2382 = vpop.f32.mrb[0].mxu0
        %v2383 = vadd.f32 0.0, %v2382
        %v2384 = vpop.f32.mrb[0].mxu0
        %2385 = vmatprep.mubr.bf16.mxu0 0
        %2386 = vmatmul.mubr.bf16.gmra.mrb[0].mxu0 %v2295
        %v2387 = vpop.f32.mrb[0].mxu0
        %v2388 = vadd.f32 0.0, %v2387
        %v2389 = vpop.f32.mrb[0].mxu0
        %v2390 = vpop.f32.mrb[0].mxu0
        %v2391 = vadd.f32 0.0, %v2390
        %v2392 = vpop.f32.mrb[0].mxu0
        %2393 = vdwg.mxu0
        %v2394 = vsel %vm1165, %v2332, -1e+30
        %v2395 = vsel %vm1166, %v2335, -1e+30
        %v2396 = vsel %vm1167, %v2340, -1e+30
        %v2397 = vsel %vm1168, %v2343, -1e+30
        %v2398 = vsel %vm1169, %v2348, -1e+30
        %v2399 = vsel %vm1170, %v2351, -1e+30
        %v2400 = vsel %vm1171, %v2356, -1e+30
        %v2401 = vsel %vm1172, %v2359, -1e+30
        %v2402 = vsel %vm1173, %v2364, -1e+30
        %v2403 = vsel %vm1174, %v2367, -1e+30
        %v2404 = vsel %vm1175, %v2372, -1e+30
        %v2405 = vsel %vm1176, %v2375, -1e+30
        %v2406 = vsel %vm1177, %v2380, -1e+30
        %v2407 = vsel %vm1178, %v2383, -1e+30
        %v2408 = vsel %vm1179, %v2388, -1e+30
        %v2409 = vsel %vm1180, %v2391, -1e+30
        %v2410 = vmax.f32 %v2394, %v2398
        %v2411 = vmax.f32 %v2395, %v2399
        %v2412 = vmax.f32 %v2396, %v2400
        %v2413 = vmax.f32 %v2397, %v2401
        %v2414 = vmax.f32 %v2410, %v2402
        %v2415 = vmax.f32 %v2411, %v2403
        %v2416 = vmax.f32 %v2412, %v2404
        %v2417 = vmax.f32 %v2413, %v2405
        %v2418 = vmax.f32 %v2414, %v2406
        %v2419 = vmax.f32 %v2415, %v2407
        %v2420 = vmax.f32 %v2416, %v2408
        %v2421 = vmax.f32 %v2417, %v2409
        %v2422 = vmax.f32 %v2418, %v2419
        %v2423 = vmax.f32 %v2420, %v2421
        %v2424 = vmax.f32 %v2422, %v2423
        %v2425 = vrot.slane %v2424, 4
        %v2426 = vmax.f32 %v2424, %v2425
        %v2427 = vrot.slane %v2426, 2
        %v2428 = vmax.f32 %v2426, %v2427
        %v2429 = vrot.slane %v2428, 1
        %v2430 = vmax.f32 %v2428, %v2429
        %v2431 = vsub.f32 %v2394, %v2430
        %v2432 = vsub.f32 %v2395, %v2430
        %v2433 = vsub.f32 %v2396, %v2430
        %v2434 = vsub.f32 %v2397, %v2430
        %v2435 = vsub.f32 %v2398, %v2430
        %v2436 = vsub.f32 %v2399, %v2430
        %v2437 = vsub.f32 %v2400, %v2430
        %v2438 = vsub.f32 %v2401, %v2430
        %v2439 = vsub.f32 %v2402, %v2430
        %v2440 = vsub.f32 %v2403, %v2430
        %v2441 = vsub.f32 %v2404, %v2430
        %v2442 = vsub.f32 %v2405, %v2430
        %v2443 = vsub.f32 %v2406, %v2430
        %v2444 = vsub.f32 %v2407, %v2430
        %v2445 = vsub.f32 %v2408, %v2430
        %v2446 = vsub.f32 %v2409, %v2430
        %v2447 = vmul.f32 %v2431, 1.442695
        %v2448 = vpow.pop %v2447
        %v2449 = vmul.f32 %v2432, 1.442695
        %v2450 = vpow.pop %v2449
        %v2451 = vmul.f32 %v2433, 1.442695
        %v2452 = vpow.pop %v2451
        %v2453 = vmul.f32 %v2434, 1.442695
        %v2454 = vpow.pop %v2453
        %v2455 = vmul.f32 %v2435, 1.442695
        %v2456 = vpow.pop %v2455
        %v2457 = vmul.f32 %v2436, 1.442695
        %v2458 = vpow.pop %v2457
        %v2459 = vmul.f32 %v2437, 1.442695
        %v2460 = vpow.pop %v2459
        %v2461 = vmul.f32 %v2438, 1.442695
        %v2462 = vpow.pop %v2461
        %v2463 = vmul.f32 %v2439, 1.442695
        %v2464 = vpow.pop %v2463
        %v2465 = vmul.f32 %v2440, 1.442695
        %v2466 = vpow.pop %v2465
        %v2467 = vmul.f32 %v2441, 1.442695
        %v2468 = vpow.pop %v2467
        %v2469 = vmul.f32 %v2442, 1.442695
        %v2470 = vpow.pop %v2469
        %v2471 = vmul.f32 %v2443, 1.442695
        %v2472 = vpow.pop %v2471
        %v2473 = vmul.f32 %v2444, 1.442695
        %v2474 = vpow.pop %v2473
        %v2475 = vmul.f32 %v2445, 1.442695
        %v2476 = vpow.pop %v2475
        %v2477 = vmul.f32 %v2446, 1.442695
        %v2478 = vpow.pop %v2477
        %v2479 = vadd.f32 %v2448, %v2450
        %v2480 = vadd.f32 %v2479, %v2452
        %v2481 = vadd.f32 %v2480, %v2454
        %v2482 = vadd.f32 %v2481, %v2456
        %v2483 = vadd.f32 %v2482, %v2458
        %v2484 = vadd.f32 %v2483, %v2460
        %v2485 = vadd.f32 %v2484, %v2462
        %v2486 = vadd.f32 %v2485, %v2464
        %v2487 = vadd.f32 %v2486, %v2466
        %v2488 = vadd.f32 %v2487, %v2468
        %v2489 = vadd.f32 %v2488, %v2470
        %v2490 = vadd.f32 %v2489, %v2472
        %v2491 = vadd.f32 %v2490, %v2474
        %v2492 = vadd.f32 %v2491, %v2476
        %v2493 = vadd.f32 %v2492, %v2478
        %v2494 = vrot.slane %v2493, 4
        %v2495 = vadd.f32 %v2493, %v2494
        %v2496 = vrot.slane %v2495, 2
        %v2497 = vadd.f32 %v2495, %v2496
        %v2498 = vrot.slane %v2497, 1
        %v2499 = vadd.f32 %v2497, %v2498
        %v2500 = vpack.c.bf16 %v2450, %v2448
        %v2501 = vpack.c.bf16 %v2454, %v2452
        %v2502 = vpack.c.bf16 %v2458, %v2456
        %v2503 = vpack.c.bf16 %v2462, %v2460
        %v2504 = vpack.c.bf16 %v2466, %v2464
        %v2505 = vpack.c.bf16 %v2470, %v2468
        %v2506 = vpack.c.bf16 %v2474, %v2472
        %v2507 = vpack.c.bf16 %v2478, %v2476
        %2508 = vmatprep.subr.bf16.mxu0 0
        %2509 = vmatpush1.bf16.msra.mxu0 %v2500
        %2510 = vmatprep.subr.bf16.mxu0 0
        %2511 = vmatpush1.bf16.msra.mxu0 %v2501
        %2512 = vmatprep.subr.bf16.mxu0 0
        %2513 = vmatpush1.bf16.msra.mxu0 %v2502
        %2514 = vmatprep.subr.bf16.mxu0 0
        %2515 = vmatpush1.bf16.msra.mxu0 %v2503
        %2516 = vmatprep.subr.bf16.mxu0 0
        %2517 = vmatpush1.bf16.msra.mxu0 %v2504
        %2518 = vmatprep.subr.bf16.mxu0 0
        %2519 = vmatpush1.bf16.msra.mxu0 %v2505
        %2520 = vmatprep.subr.bf16.mxu0 0
        %2521 = vmatpush1.bf16.msra.mxu0 %v2506
        %2522 = vmatprep.subr.bf16.mxu0 0
        %2523 = vmatpush1.bf16.msra.mxu0 %v2507
        %2524 = vmatprep.subr.bf16.mxu0 0
        %2525 = vmatpush1.bf16.msra.mxu0 0
        %2526 = vmatprep.subr.bf16.mxu0 0
        %2527 = vmatpush1.bf16.msra.mxu0 0
        %2528 = vmatprep.subr.bf16.mxu0 0
        %2529 = vmatpush1.bf16.msra.mxu0 0
        %2530 = vmatprep.subr.bf16.mxu0 0
        %2531 = vmatpush1.bf16.msra.mxu0 0
        %2532 = vmatprep.subr.bf16.mxu0 0
        %2533 = vmatpush1.bf16.msra.mxu0 0
        %2534 = vmatprep.subr.bf16.mxu0 0
        %2535 = vmatpush1.bf16.msra.mxu0 0
        %2536 = vmatprep.subr.bf16.mxu0 0
        %2537 = vmatpush1.bf16.msra.mxu0 0
        %2538 = vmatprep.subr.bf16.mxu0 0
        %2539 = vmatpush1.bf16.msra.mxu0 0
        %2540 = vmatprep.mubr.bf16.mxu0 0
        %2541 = vmatmul.mubr.bf16.gmra.mrb[0].mxu0 %v977
        %v2542 = vpop.f32.mrb[0].mxu0
        %v2543 = vadd.f32 0.0, %v2542
        %v2544 = vpop.f32.mrb[0].mxu0
        %v2545 = vpop.f32.mrb[0].mxu0
        %v2546 = vadd.f32 0.0, %v2545
        %v2547 = vpop.f32.mrb[0].mxu0
        %2548 = vdwg.mxu0
        %v2549 = vrcp.pop %v2499
        %v2550 = vmul.f32 %v2543, %v2549
        %v2551 = vmul.f32 %v2546, %v2549
        %s2552 = scalar_lea.vmem %s9, 96
        %v2553 = vld [vmem:[%s2552] sm:$0xf]
        %v2554 = vld [vmem:[%s2552 + $0x4] sm:$0xf]
        %v2555 = vld [vmem:[%s2552 + $0x8] sm:$0xf]
        %v2556 = vld [vmem:[%s2552 + $0xc] sm:$0xf]
        %v2557 = vld [vmem:[%s2552 + $0x10] sm:$0xf]
        %v2558 = vld [vmem:[%s2552 + $0x14] sm:$0xf]
        %v2559 = vld [vmem:[%s2552 + $0x18] sm:$0xf]
        %v2560 = vld [vmem:[%s2552 + $0x1c] sm:$0xf]
        %v2561 = vpack.c.bf16 %v2551, %v2550
        %v2570 = vunpack.c.l.b16 %v2553
        %v2571 = vunpack.c.l.b16 %v2554
        %v2572 = vunpack.c.l.b16 %v2555
        %v2573 = vunpack.c.l.b16 %v2556
        %v2574 = vunpack.c.l.b16 %v2557
        %v2575 = vunpack.c.l.b16 %v2558
        %v2576 = vunpack.c.l.b16 %v2559
        %v2577 = vunpack.c.l.b16 %v2560
        %v2578 = vpack.c.b16 %v2571, %v2570
        %v2579 = vpack.c.b16 %v2573, %v2572
        %v2580 = vpack.c.b16 %v2575, %v2574
        %v2581 = vpack.c.b16 %v2577, %v2576
        %v2583 = vsel %vm1027, %v2578, 0
        %v2586 = vsel %vm1027, %v2579, 0
        %v2589 = vsel %vm1027, %v2580, 0
        %v2592 = vsel %vm1027, %v2581, 0
        %2594 = vmatprep.subr.bf16.mxu0 0
        %2595 = vmatpush1.bf16.msra.mxu0 %v2561
        %2596 = vmatprep.subr.bf16.mxu0 0
        %2597 = vmatpush1.bf16.msra.mxu0 0
        %2598 = vmatprep.subr.bf16.mxu0 0
        %2599 = vmatpush1.bf16.msra.mxu0 0
        %2600 = vmatprep.subr.bf16.mxu0 0
        %2601 = vmatpush1.bf16.msra.mxu0 0
        %2602 = vmatprep.subr.bf16.mxu0 0
        %2603 = vmatpush1.bf16.msra.mxu0 0
        %2604 = vmatprep.subr.bf16.mxu0 0
        %2605 = vmatpush1.bf16.msra.mxu0 0
        %2606 = vmatprep.subr.bf16.mxu0 0
        %2607 = vmatpush1.bf16.msra.mxu0 0
        %2608 = vmatprep.subr.bf16.mxu0 0
        %2609 = vmatpush1.bf16.msra.mxu0 0
        %2610 = vmatprep.subr.bf16.mxu0 0
        %2611 = vmatpush1.bf16.msra.mxu0 0
        %2612 = vmatprep.subr.bf16.mxu0 0
        %2613 = vmatpush1.bf16.msra.mxu0 0
        %2614 = vmatprep.subr.bf16.mxu0 0
        %2615 = vmatpush1.bf16.msra.mxu0 0
        %2616 = vmatprep.subr.bf16.mxu0 0
        %2617 = vmatpush1.bf16.msra.mxu0 0
        %2618 = vmatprep.subr.bf16.mxu0 0
        %2619 = vmatpush1.bf16.msra.mxu0 0
        %2620 = vmatprep.subr.bf16.mxu0 0
        %2621 = vmatpush1.bf16.msra.mxu0 0
        %2622 = vmatprep.subr.bf16.mxu0 0
        %2623 = vmatpush1.bf16.msra.mxu0 0
        %2624 = vmatprep.subr.bf16.mxu0 0
        %2625 = vmatpush1.bf16.msra.mxu0 0
        %2626 = vmatprep.mubr.bf16.mxu0 0
        %2627 = vmatmul.mubr.bf16.gmra.mrb[0].mxu0 %v2583
        %v2628 = vpop.f32.mrb[0].mxu0
        %v2629 = vadd.f32 0.0, %v2628
        %v2630 = vpop.f32.mrb[0].mxu0
        %v2631 = vpop.f32.mrb[0].mxu0
        %v2632 = vadd.f32 0.0, %v2631
        %v2633 = vpop.f32.mrb[0].mxu0
        %2634 = vmatprep.mubr.bf16.mxu0 0
        %2635 = vmatmul.mubr.bf16.gmra.mrb[0].mxu0 %v2586
        %v2636 = vpop.f32.mrb[0].mxu0
        %v2637 = vadd.f32 0.0, %v2636
        %v2638 = vpop.f32.mrb[0].mxu0
        %v2639 = vpop.f32.mrb[0].mxu0
        %v2640 = vadd.f32 0.0, %v2639
        %v2641 = vpop.f32.mrb[0].mxu0
        %2642 = vmatprep.mubr.bf16.mxu0 0
        %2643 = vmatmul.mubr.bf16.gmra.mrb[0].mxu0 %v2589
        %v2644 = vpop.f32.mrb[0].mxu0
        %v2645 = vadd.f32 0.0, %v2644
        %v2646 = vpop.f32.mrb[0].mxu0
        %v2647 = vpop.f32.mrb[0].mxu0
        %v2648 = vadd.f32 0.0, %v2647
        %v2649 = vpop.f32.mrb[0].mxu0
        %2650 = vmatprep.mubr.bf16.mxu0 0
        %2651 = vmatmul.mubr.bf16.gmra.mrb[0].mxu0 %v2592
        %v2652 = vpop.f32.mrb[0].mxu0
        %v2653 = vadd.f32 0.0, %v2652
        %v2654 = vpop.f32.mrb[0].mxu0
        %v2655 = vpop.f32.mrb[0].mxu0
        %v2656 = vadd.f32 0.0, %v2655
        %v2657 = vpop.f32.mrb[0].mxu0
        %2658 = vdwg.mxu0
        %v2659 = vadd.f32 %v2249, %v2629
        %v2660 = vadd.f32 %v2250, %v2632
        %v2661 = vadd.f32 %v2251, %v2637
        %v2662 = vadd.f32 %v2252, %v2640
        %v2663 = vadd.f32 %v2253, %v2645
        %v2664 = vadd.f32 %v2254, %v2648
        %v2665 = vadd.f32 %v2255, %v2653
        %v2666 = vadd.f32 %v2256, %v2656
        %v2667 = vld [vmem:[%s10] sm:$0xff]
        %v2668 = vld [vmem:[%s10 + $0x8] sm:$0xff]
        %v2669 = vld [vmem:[%s10 + $0x10] sm:$0xff]
        %v2670 = vld [vmem:[%s10 + $0x18] sm:$0xff]
        %v2671 = vld [vmem:[%s10 + $0x20] sm:$0xff]
        %v2672 = vld [vmem:[%s10 + $0x28] sm:$0xff]
        %v2673 = vld [vmem:[%s10 + $0x30] sm:$0xff]
        %v2674 = vld [vmem:[%s10 + $0x38] sm:$0xff]
        %2676 = vset.pattern.permute.xlu0 0
        %2677 = vperm.xlu0 %2676, %v2667
        %v2678 = vpop.permute.xlu0 %2677
        %2681 = vset.pattern.permute.xlu0 0
        %2682 = vperm.xlu0 %2681, %v2668
        %v2683 = vpop.permute.xlu0 %2682
        %2686 = vset.pattern.permute.xlu0 0
        %2687 = vperm.xlu0 %2686, %v2669
        %v2688 = vpop.permute.xlu0 %2687
        %2691 = vset.pattern.permute.xlu0 0
        %2692 = vperm.xlu0 %2691, %v2670
        %v2693 = vpop.permute.xlu0 %2692
        %2696 = vset.pattern.permute.xlu0 0
        %2697 = vperm.xlu0 %2696, %v2671
        %v2698 = vpop.permute.xlu0 %2697
        %2701 = vset.pattern.permute.xlu0 0
        %2702 = vperm.xlu0 %2701, %v2672
        %v2703 = vpop.permute.xlu0 %2702
        %2706 = vset.pattern.permute.xlu0 0
        %2707 = vperm.xlu0 %2706, %v2673
        %v2708 = vpop.permute.xlu0 %2707
        %2711 = vset.pattern.permute.xlu0 0
        %2712 = vperm.xlu0 %2711, %v2674
        %v2713 = vpop.permute.xlu0 %2712
        %v2715 = vadd.f32 %v2659, %v2678
        %v2716 = vadd.f32 %v2660, %v2683
        %v2717 = vadd.f32 %v2661, %v2688
        %v2718 = vadd.f32 %v2662, %v2693
        %v2719 = vadd.f32 %v2663, %v2698
        %v2720 = vadd.f32 %v2664, %v2703
        %v2721 = vadd.f32 %v2665, %v2708
        %v2722 = vadd.f32 %v2666, %v2713
        %2723 = vst [vmem:[%s453] sm:$0xff] %v2715
        %2724 = vst [vmem:[%s453 + $0x8] sm:$0xff] %v2716
        %2725 = vst [vmem:[%s453 + $0x10] sm:$0xff] %v2717
        %2726 = vst [vmem:[%s453 + $0x18] sm:$0xff] %v2718
        %2727 = vst [vmem:[%s453 + $0x20] sm:$0xff] %v2719
        %2728 = vst [vmem:[%s453 + $0x28] sm:$0xff] %v2720
        %2729 = vst [vmem:[%s453 + $0x30] sm:$0xff] %v2721
        %2730 = vst [vmem:[%s453 + $0x38] sm:$0xff] %v2722
        %s2731 = sand.u32 %s281, 1
        %s2732 = scalar_lea.sflag [#allocation4], %s2731
        %s2733 = sand.u32 %s281, 1
        %s2734 = smul.addr %s2733, 64
        %s2735 = scalar_lea.vmem [#allocation8], %s2734
        // Predicated region
        $region77: #{tpu_custom_call.1} parent=63 // pred_check
          %p2736 = pneg %p291
        $region78: #{tpu_custom_call.1} parent=63 // pred_check_branch
          %2738 = sbr.rel (%p2736) target = $region80
        $region79: #{tpu_custom_call.1} parent=63 // pred_region
          %s2740 = ssub.s32 1024, 1024
          %2741 = vsyncadd %s2732, %s2740
          %s2742 = smul.addr %s27, 8
          %s2743 = smul.addr %s2742, 128
          %s2744 = scalar_lea.hbm %s11, %s2743
          %s2745 = sshll.u32 %s2735, 4
          %s2746 = int_to_ptr.vmem [resolvable:$true] %s2745
          %2751 = dma.vmem_to_hbm [thread:$0]  %s2746, 1024, %s2744, %s2732, 128, 128, 8
        $region80: #{tpu_custom_call.1} parent=63 // pred_fallthru
          _
      $region64: #{tpu_custom_call.1} parent=5 // pred_fallthru
        _
      %p2752 = scmp.le.s32.totalorder 2, %s22
      // Predicated region
      $region81: #{tpu_custom_call.1} parent=5 // pred_check
        %p2753 = pneg %p2752
      $region82: #{tpu_custom_call.1} parent=5 // pred_check_branch
        %2755 = sbr.rel (%p2753) target = $region84
      $region83: #{tpu_custom_call.1} parent=5 // pred_region
        %s2756 = ssub.s32 %s22, 2
        // Predicated region
        $region85: #{tpu_custom_call.1} parent=83 // pred_check
          %p2757 = pneg %p297
        $region86: #{tpu_custom_call.1} parent=83 // pred_check_branch
          %2759 = sbr.rel (%p2757) target = $region88
        $region87: #{tpu_custom_call.1} parent=83 // pred_region
          %s2760 = sand.u32 %s282, 1
          %s2761 = scalar_lea.sflag [#allocation4], %s2760
          %s2762 = sand.u32 %s282, 1
          %s2763 = smul.addr %s2762, 64
          %s2764 = scalar_lea.vmem [#allocation8], %s2763
          %2765 = dma.done %s2761, 1024
        $region88: #{tpu_custom_call.1} parent=83 // pred_fallthru
          _
      $region84: #{tpu_custom_call.1} parent=5 // pred_fallthru
        _
    $region6: #{tpu_custom_call.1} parent=1 // loop_footer
      %s26 = sadd.s32 1, %s22
    $region7: #{tpu_custom_call.1} parent=1 // loop_footer_branch
      %21 = sbr.rel target = $region3
    $region8: #{tpu_custom_call.1} parent=1 // loop_exit
      _
    %2766 = vsyncpa [#allocation3], 1
    %s2767 = scalar_lea.sflag [#allocation3], 1
    %2768 = vsyncpa %s2767, 1
    %2769 = vsyncpa [#allocation6], 1
    %2770 = vsyncpa [#allocation4], 1
    %s2771 = scalar_lea.sflag [#allocation4], 1
    %2772 = vsyncpa %s2771, 1

</llo_original>
